<compile_context>
chip_gen: v7x
topology: tpu7x:2x2x1
jax: 0.10.0
libtpu: 0.0.40
codegen_flags: <defaults>
</compile_context>

<pallas_src>
import functools
import math

import jax
import jax.numpy as jnp
import numpy as np
from jax.experimental import pallas as pl
from jax.experimental.pallas import tpu as pltpu


def _deq_attention_kernel(x_ref, wqkv_ref, wproj_ref, bproj_ref, o_ref, k_sc, v_sc,
                          *, num_heads, head_dim, dim, tq):
    """One grid step = (batch element b, query-row block qi).

    x_ref:     (N, C)  bf16   full sequence for this batch element (resident across qi)
    wqkv_ref:  (3, C, C) bf16 [Wq^T * scale, Wk^T, Wv^T]
    wproj_ref: (H, D, C) bf16 Wproj^T split per head along its input rows
    bproj_ref: (1, C)  f32    proj bias
    o_ref:     (TQ, C)        output rows for this q block
    k_sc,v_sc: (H, N, D) bf16 VMEM scratch, filled at qi == 0, reused for qi > 0
    """
    H, D, C = num_heads, head_dim, dim
    qi = pl.program_id(1)

    def split_heads(y):
        # (rows, C) f32 -> (H, rows, D) bf16 ; head h lives in columns [h*D, (h+1)*D).
        # One bulk relayout per tensor (leading-axis stack), done once per tensor —
        # not per-head compute as in the original per-head matmul loop.
        return jnp.stack([y[:, h * D:(h + 1) * D] for h in range(H)],
                         axis=0).astype(jnp.bfloat16)

    # --- K/V projection: once per batch element, cached in VMEM scratch. -------------
    @pl.when(qi == 0)
    def _():
        xf = x_ref[...]                                                    # (N, C) bf16
        k2 = jnp.dot(xf, wqkv_ref[1], preferred_element_type=jnp.float32)  # (N, C) f32
        v2 = jnp.dot(xf, wqkv_ref[2], preferred_element_type=jnp.float32)  # (N, C) f32
        k_sc[...] = split_heads(k2)                                        # (H, N, D)
        v_sc[...] = split_heads(v2)

    # --- Q projection for this query-row block (scale pre-folded into the weight). ---
    if tq == x_ref.shape[0]:
        xq = x_ref[...]                                                    # (TQ, C)
    else:
        row0 = pl.multiple_of(qi * tq, tq)
        xq = x_ref[pl.ds(row0, tq), :]                                     # (TQ, C)
    q2 = jnp.dot(xq, wqkv_ref[0], preferred_element_type=jnp.float32)      # (TQ, C) f32
    q3 = split_heads(q2)                                                   # (H, TQ, D)

    # --- Batched-over-heads attention (bf16 MXU operands, f32 softmax). --------------
    k3 = k_sc[...]
    v3 = v_sc[...]
    s = jnp.einsum('hqd,hkd->hqk', q3, k3,
                   preferred_element_type=jnp.float32)                     # (H, TQ, N)
    m = jnp.max(s, axis=-1, keepdims=True)
    p = jnp.exp(s - m)                                                     # f32
    l = jnp.sum(p, axis=-1, keepdims=True)                                 # (H, TQ, 1)
    o3 = jnp.einsum('hqk,hkd->hqd', p.astype(jnp.bfloat16), v3,
                    preferred_element_type=jnp.float32)                    # (H, TQ, D)
    o3 = o3 * pl.reciprocal(l, approx=True)       # deferred softmax normalization (EUP)

    # --- Output projection, fused per head (no lane concat / merge relayout). --------
    acc = jnp.dot(o3[0].astype(jnp.bfloat16), wproj_ref[0],
                  preferred_element_type=jnp.float32)                      # (TQ, C)
    for h in range(1, H):
        acc = acc + jnp.dot(o3[h].astype(jnp.bfloat16), wproj_ref[h],
                            preferred_element_type=jnp.float32)
    o_ref[...] = (acc + bproj_ref[...]).astype(o_ref.dtype)


def deq_attention(x, w_qkv, w_proj, b_proj, *, num_heads, q_block=128):
    """x: (B, N, C). w_qkv: (3C, C) PyTorch nn.Linear layout. w_proj: (C, C). b_proj: (C,)."""
    B, N, C = x.shape
    assert C % num_heads == 0, "dim should be divisible by num_heads"
    D = C // num_heads
    scale = D ** (-0.5)

    # Query-row tiling: bounds VMEM independent of N (and feeds megacore on v7x).
    TQ = q_block if (N % q_block == 0) else N
    num_q_blocks = N // TQ

    # Pre-transform weights (plain-JAX glue, traced once):
    #   * transpose to (in, out) so kernel does x @ W
    #   * fold the softmax scale into the Q weight
    #   * group as (3, C, C) / (H, D, C) so all in-kernel slices are leading-axis slices
    wqkv_t = jnp.transpose(w_qkv.astype(jnp.float32))        # (C, 3C)
    wq = wqkv_t[:, :C] * scale
    wk = wqkv_t[:, C:2 * C]
    wv = wqkv_t[:, 2 * C:]
    wqkv3 = jnp.stack([wq, wk, wv], axis=0).astype(jnp.bfloat16)           # (3, C, C)
    wproj_h = jnp.transpose(w_proj.astype(jnp.float32)).reshape(num_heads, D, C)
    wproj_h = wproj_h.astype(jnp.bfloat16)                                 # (H, D, C)
    bproj_2d = b_proj.reshape(1, C).astype(jnp.float32)                    # (1, C)
    x_bf16 = x.astype(jnp.bfloat16)

    kernel = functools.partial(
        _deq_attention_kernel,
        num_heads=num_heads, head_dim=D, dim=C, tq=TQ)

    flops = int(2 * B * N * C * (3 * C)              # qkv projection
                + 4 * B * num_heads * N * N * D      # q k^T and p v
                + 2 * B * N * C * C)                 # output projection
    transcendentals = int(B * num_heads * N * N)     # exp
    bytes_accessed = int(2 * B * N * C                               # x (bf16)
                         + 2 * (3 * C * C + num_heads * D * C)       # weights (bf16)
                         + 4 * C                                     # bias
                         + jnp.dtype(x.dtype).itemsize * B * N * C)  # output

    return pl.pallas_call(
        kernel,
        out_shape=jax.ShapeDtypeStruct((B, N, C), x.dtype),
        grid_spec=pltpu.PrefetchScalarGridSpec(
            num_scalar_prefetch=0,
            grid=(B, num_q_blocks),
            in_specs=[
                pl.BlockSpec((None, N, C), lambda b, q: (b, 0, 0)),       # x (full seq / batch)
                pl.BlockSpec((3, C, C), lambda b, q: (0, 0, 0)),          # qkv weights (resident)
                pl.BlockSpec((num_heads, D, C), lambda b, q: (0, 0, 0)),  # proj weight (resident)
                pl.BlockSpec((1, C), lambda b, q: (0, 0)),                # proj bias
            ],
            out_specs=pl.BlockSpec((None, TQ, C), lambda b, q: (b, q, 0)),
            scratch_shapes=[
                pltpu.VMEM((num_heads, N, D), jnp.bfloat16),   # K cache (per batch element)
                pltpu.VMEM((num_heads, N, D), jnp.bfloat16),   # V cache (per batch element)
            ],
        ),
        compiler_params=pltpu.CompilerParams(
            dimension_semantics=("parallel", "arbitrary"),
            vmem_limit_bytes=48 * 1024 * 1024,     # stays under v7x's 64 MiB physical VMEM
        ),
        cost_estimate=pl.CostEstimate(flops=flops,
                                      transcendentals=transcendentals,
                                      bytes_accessed=bytes_accessed),
    )(x_bf16, wqkv3, wproj_h, bproj_2d)


def _reference(x, w_qkv, w_proj, b_proj, num_heads):
    """Pure-JAX f32 reference mirroring the PyTorch forward."""
    B, N, C = x.shape
    D = C // num_heads
    scale = D ** (-0.5)
    qkv = jnp.einsum('bnc,oc->bno', x, w_qkv)                        # (B, N, 3C)
    qkv = qkv.reshape(B, N, 3, num_heads, D).transpose(2, 0, 3, 1, 4)
    q, k, v = qkv[0], qkv[1], qkv[2]                                 # (B, H, N, D)
    attn = jnp.einsum('bhnd,bhmd->bhnm', q * scale, k)
    attn = jax.nn.softmax(attn, axis=-1)
    out = jnp.einsum('bhnm,bhmd->bhnd', attn, v)                     # (B, H, N, D)
    out = out.transpose(0, 2, 1, 3).reshape(B, N, C)
    return jnp.einsum('bnc,oc->bno', out, w_proj) + b_proj


def _run_case(key, B, N, C, num_heads):
    kx, kqkv, kproj, kb = jax.random.split(key, 4)
    x = jax.random.normal(kx, (B, N, C), dtype=jnp.float32)
    bound = 1.0 / math.sqrt(C)
    w_qkv = jax.random.uniform(kqkv, (3 * C, C), jnp.float32, -bound, bound)
    w_proj = jax.random.uniform(kproj, (C, C), jnp.float32, -bound, bound)
    b_proj = jax.random.uniform(kb, (C,), jnp.float32, -bound, bound)

    out = deq_attention(x, w_qkv, w_proj, b_proj, num_heads=num_heads)
    out = jax.block_until_ready(out)

    ref = _reference(x, w_qkv, w_proj, b_proj, num_heads)
    # bf16 MXU operands -> loosened tolerance vs the f32 reference.
    np.testing.assert_allclose(np.asarray(out), np.asarray(ref), rtol=3e-2, atol=3e-2)


if __name__ == "__main__":
    key = jax.random.PRNGKey(0)
    k1, k2 = jax.random.split(key)

    # Small config (single q block, whole sequence per grid step).
    _run_case(k1, B=2, N=16, C=32, num_heads=4)
    # Slightly longer sequence to exercise the q-row tiling path (TQ=128, 2 q blocks).
    _run_case(k2, B=1, N=256, C=64, num_heads=4)

    print("KERNEL_OK")
</pallas_src>

<mosaic_0001>
module attributes {stable_mosaic.version = 11 : i64} {
  func.func @_deq_attention_kernel(%arg0: i32, %arg1: i32, %arg2: memref<1x16x32xbf16, #tpu.memory_space<vmem>>, %arg3: memref<3x32x32xbf16, #tpu.memory_space<vmem>>, %arg4: memref<4x8x32xbf16, #tpu.memory_space<vmem>>, %arg5: memref<1x32xf32, #tpu.memory_space<vmem>>, %arg6: memref<1x16x32xf32, #tpu.memory_space<vmem>>, %arg7: memref<4x16x8xbf16, #tpu.memory_space<vmem>>, %arg8: memref<4x16x8xbf16, #tpu.memory_space<vmem>>) attributes {dimension_semantics = [#tpu.dimension_semantics<parallel>, #tpu.dimension_semantics<arbitrary>], iteration_bounds = array<i64: 2, 1>, scalar_prefetch = 0 : i64, scratch_operands = 2 : i64, tpu.core_type = #tpu.core_type<tc>, window_params = [{transform_indices = @transform_0, window_bounds = array<i64: 1, 16, 32>}, {pipeline_mode = #tpu.pipeline_mode<synchronous>, transform_indices = @transform_1, window_bounds = array<i64: 3, 32, 32>}, {pipeline_mode = #tpu.pipeline_mode<synchronous>, transform_indices = @transform_2, window_bounds = array<i64: 4, 8, 32>}, {pipeline_mode = #tpu.pipeline_mode<synchronous>, transform_indices = @transform_3, window_bounds = array<i64: 1, 32>}, {transform_indices = @transform_4, window_bounds = array<i64: 1, 16, 32>}]} {
    %c0_i32 = arith.constant 0 : i32
    %0 = arith.cmpi eq, %arg1, %c0_i32 : i32
    %1 = arith.extui %0 : i1 to i32
    %c0_i32_0 = arith.constant 0 : i32
    %2 = arith.cmpi ne, %1, %c0_i32_0 : i32
    scf.if %2 {
      %c0_34 = arith.constant 0 : index
      %c0_35 = arith.constant 0 : index
      %c0_36 = arith.constant 0 : index
      %66 = vector.load %arg2[%c0_34, %c0_35, %c0_36] : memref<1x16x32xbf16, #tpu.memory_space<vmem>>, vector<1x16x32xbf16>
      %67 = vector.shape_cast %66 : vector<1x16x32xbf16> to vector<16x32xbf16>
      %c1_37 = arith.constant 1 : index
      %c0_38 = arith.constant 0 : index
      %c0_39 = arith.constant 0 : index
      %68 = vector.load %arg3[%c1_37, %c0_38, %c0_39] : memref<3x32x32xbf16, #tpu.memory_space<vmem>>, vector<1x32x32xbf16>
      %69 = vector.shape_cast %68 : vector<1x32x32xbf16> to vector<32x32xbf16>
      %cst_40 = arith.constant dense<0.000000e+00> : vector<16x32xf32>
      %70 = tpu.matmul %67, %69, %cst_40 {dimension_numbers = #tpu.dot_dimension_numbers<[1], [0], [0], [1], [0, 0, 1, 1], [], []>} : vector<16x32xbf16>, vector<32x32xbf16>, vector<16x32xf32> -> vector<16x32xf32>
      %c2_41 = arith.constant 2 : index
      %c0_42 = arith.constant 0 : index
      %c0_43 = arith.constant 0 : index
      %71 = vector.load %arg3[%c2_41, %c0_42, %c0_43] : memref<3x32x32xbf16, #tpu.memory_space<vmem>>, vector<1x32x32xbf16>
      %72 = vector.shape_cast %71 : vector<1x32x32xbf16> to vector<32x32xbf16>
      %cst_44 = arith.constant dense<0.000000e+00> : vector<16x32xf32>
      %73 = tpu.matmul %67, %72, %cst_44 {dimension_numbers = #tpu.dot_dimension_numbers<[1], [0], [0], [1], [0, 0, 1, 1], [], []>} : vector<16x32xbf16>, vector<32x32xbf16>, vector<16x32xf32> -> vector<16x32xf32>
      %74 = vector.extract_strided_slice %70 {offsets = [0, 0], sizes = [16, 8], strides = [1, 1]} : vector<16x32xf32> to vector<16x8xf32>
      %75 = vector.extract_strided_slice %70 {offsets = [0, 8], sizes = [16, 8], strides = [1, 1]} : vector<16x32xf32> to vector<16x8xf32>
      %76 = vector.extract_strided_slice %70 {offsets = [0, 16], sizes = [16, 8], strides = [1, 1]} : vector<16x32xf32> to vector<16x8xf32>
      %77 = vector.extract_strided_slice %70 {offsets = [0, 24], sizes = [16, 8], strides = [1, 1]} : vector<16x32xf32> to vector<16x8xf32>
      %78 = vector.shape_cast %74 : vector<16x8xf32> to vector<1x16x8xf32>
      %79 = vector.shape_cast %75 : vector<16x8xf32> to vector<1x16x8xf32>
      %80 = vector.shape_cast %76 : vector<16x8xf32> to vector<1x16x8xf32>
      %81 = vector.shape_cast %77 : vector<16x8xf32> to vector<1x16x8xf32>
      %82 = tpu.concatenate %78, %79, %80, %81 in 0 : vector<1x16x8xf32>, vector<1x16x8xf32>, vector<1x16x8xf32>, vector<1x16x8xf32> -> vector<4x16x8xf32>
      %83 = arith.truncf %82 : vector<4x16x8xf32> to vector<4x16x8xbf16>
      %c0_45 = arith.constant 0 : index
      %c0_46 = arith.constant 0 : index
      %c0_47 = arith.constant 0 : index
      %84 = vector.load %arg7[%c0_45, %c0_46, %c0_47] : memref<4x16x8xbf16, #tpu.memory_space<vmem>>, vector<4x16x8xbf16>
      tpu.vector_store %arg7[%c0_45, %c0_46, %c0_47], %83 {strides = array<i32>} : memref<4x16x8xbf16, #tpu.memory_space<vmem>>, vector<4x16x8xbf16>,
      %85 = vector.extract_strided_slice %73 {offsets = [0, 0], sizes = [16, 8], strides = [1, 1]} : vector<16x32xf32> to vector<16x8xf32>
      %86 = vector.extract_strided_slice %73 {offsets = [0, 8], sizes = [16, 8], strides = [1, 1]} : vector<16x32xf32> to vector<16x8xf32>
      %87 = vector.extract_strided_slice %73 {offsets = [0, 16], sizes = [16, 8], strides = [1, 1]} : vector<16x32xf32> to vector<16x8xf32>
      %88 = vector.extract_strided_slice %73 {offsets = [0, 24], sizes = [16, 8], strides = [1, 1]} : vector<16x32xf32> to vector<16x8xf32>
      %89 = vector.shape_cast %85 : vector<16x8xf32> to vector<1x16x8xf32>
      %90 = vector.shape_cast %86 : vector<16x8xf32> to vector<1x16x8xf32>
      %91 = vector.shape_cast %87 : vector<16x8xf32> to vector<1x16x8xf32>
      %92 = vector.shape_cast %88 : vector<16x8xf32> to vector<1x16x8xf32>
      %93 = tpu.concatenate %89, %90, %91, %92 in 0 : vector<1x16x8xf32>, vector<1x16x8xf32>, vector<1x16x8xf32>, vector<1x16x8xf32> -> vector<4x16x8xf32>
      %94 = arith.truncf %93 : vector<4x16x8xf32> to vector<4x16x8xbf16>
      %c0_48 = arith.constant 0 : index
      %c0_49 = arith.constant 0 : index
      %c0_50 = arith.constant 0 : index
      %95 = vector.load %arg8[%c0_48, %c0_49, %c0_50] : memref<4x16x8xbf16, #tpu.memory_space<vmem>>, vector<4x16x8xbf16>
      tpu.vector_store %arg8[%c0_48, %c0_49, %c0_50], %94 {strides = array<i32>} : memref<4x16x8xbf16, #tpu.memory_space<vmem>>, vector<4x16x8xbf16>,
    } else {
    }
    %c0 = arith.constant 0 : index
    %c0_1 = arith.constant 0 : index
    %c0_2 = arith.constant 0 : index
    %3 = vector.load %arg2[%c0, %c0_1, %c0_2] : memref<1x16x32xbf16, #tpu.memory_space<vmem>>, vector<1x16x32xbf16>
    %4 = vector.shape_cast %3 : vector<1x16x32xbf16> to vector<16x32xbf16>
    %c0_3 = arith.constant 0 : index
    %c0_4 = arith.constant 0 : index
    %c0_5 = arith.constant 0 : index
    %5 = vector.load %arg3[%c0_3, %c0_4, %c0_5] : memref<3x32x32xbf16, #tpu.memory_space<vmem>>, vector<1x32x32xbf16>
    %6 = vector.shape_cast %5 : vector<1x32x32xbf16> to vector<32x32xbf16>
    %cst = arith.constant dense<0.000000e+00> : vector<16x32xf32>
    %7 = tpu.matmul %4, %6, %cst {dimension_numbers = #tpu.dot_dimension_numbers<[1], [0], [0], [1], [0, 0, 1, 1], [], []>} : vector<16x32xbf16>, vector<32x32xbf16>, vector<16x32xf32> -> vector<16x32xf32>
    %8 = vector.extract_strided_slice %7 {offsets = [0, 0], sizes = [16, 8], strides = [1, 1]} : vector<16x32xf32> to vector<16x8xf32>
    %9 = vector.extract_strided_slice %7 {offsets = [0, 8], sizes = [16, 8], strides = [1, 1]} : vector<16x32xf32> to vector<16x8xf32>
    %10 = vector.extract_strided_slice %7 {offsets = [0, 16], sizes = [16, 8], strides = [1, 1]} : vector<16x32xf32> to vector<16x8xf32>
    %11 = vector.extract_strided_slice %7 {offsets = [0, 24], sizes = [16, 8], strides = [1, 1]} : vector<16x32xf32> to vector<16x8xf32>
    %12 = vector.shape_cast %8 : vector<16x8xf32> to vector<1x16x8xf32>
    %13 = vector.shape_cast %9 : vector<16x8xf32> to vector<1x16x8xf32>
    %14 = vector.shape_cast %10 : vector<16x8xf32> to vector<1x16x8xf32>
    %15 = vector.shape_cast %11 : vector<16x8xf32> to vector<1x16x8xf32>
    %16 = tpu.concatenate %12, %13, %14, %15 in 0 : vector<1x16x8xf32>, vector<1x16x8xf32>, vector<1x16x8xf32>, vector<1x16x8xf32> -> vector<4x16x8xf32>
    %17 = arith.truncf %16 : vector<4x16x8xf32> to vector<4x16x8xbf16>
    %c0_6 = arith.constant 0 : index
    %c0_7 = arith.constant 0 : index
    %c0_8 = arith.constant 0 : index
    %18 = vector.load %arg7[%c0_6, %c0_7, %c0_8] : memref<4x16x8xbf16, #tpu.memory_space<vmem>>, vector<4x16x8xbf16>
    %c0_9 = arith.constant 0 : index
    %c0_10 = arith.constant 0 : index
    %c0_11 = arith.constant 0 : index
    %19 = vector.load %arg8[%c0_9, %c0_10, %c0_11] : memref<4x16x8xbf16, #tpu.memory_space<vmem>>, vector<4x16x8xbf16>
    "tpu.trace_start"() <{level = 10 : i32, message = "hqd,hkd->hqk"}> : () -> ()
    %cst_12 = arith.constant dense<0.000000e+00> : vector<4x16x16xf32>
    %20 = tpu.matmul %17, %18, %cst_12 {dimension_numbers = #tpu.dot_dimension_numbers<[2], [2], [1], [1], [0, 0, 0, 1, 1, 1], [0], [0]>} : vector<4x16x8xbf16>, vector<4x16x8xbf16>, vector<4x16x16xf32> -> vector<4x16x16xf32>
    "tpu.trace_stop"() : () -> ()
    %cst_13 = arith.constant dense<0xFF800000> : vector<4x16xf32>
    %21 = vector.multi_reduction <maximumf>, %20, %cst_13 [2] : vector<4x16x16xf32> to vector<4x16xf32>
    %22 = vector.shape_cast %21 : vector<4x16xf32> to vector<4x16x1xf32>
    %23 = vector.broadcast %22 : vector<4x16x1xf32> to vector<4x16x16xf32>
    %24 = arith.subf %20, %23 : vector<4x16x16xf32>
    %25 = math.exp %24 : vector<4x16x16xf32>
    %cst_14 = arith.constant dense<0.000000e+00> : vector<4x16xf32>
    %26 = vector.multi_reduction <add>, %25, %cst_14 [2] : vector<4x16x16xf32> to vector<4x16xf32>
    %27 = vector.shape_cast %26 : vector<4x16xf32> to vector<4x16x1xf32>
    %28 = arith.truncf %25 : vector<4x16x16xf32> to vector<4x16x16xbf16>
    "tpu.trace_start"() <{level = 10 : i32, message = "hqk,hkd->hqd"}> : () -> ()
    %cst_15 = arith.constant dense<0.000000e+00> : vector<4x16x8xf32>
    %29 = tpu.matmul %28, %19, %cst_15 {dimension_numbers = #tpu.dot_dimension_numbers<[2], [1], [1], [2], [0, 0, 0, 1, 1, 2], [0], [0]>} : vector<4x16x16xbf16>, vector<4x16x8xbf16>, vector<4x16x8xf32> -> vector<4x16x8xf32>
    "tpu.trace_stop"() : () -> ()
    %30 = tpu.reciprocal %27 {approx = true} : vector<4x16x1xf32> -> vector<4x16x1xf32>
    %31 = vector.broadcast %30 : vector<4x16x1xf32> to vector<4x16x8xf32>
    %32 = arith.mulf %29, %31 : vector<4x16x8xf32>
    %33 = vector.extract_strided_slice %32 {offsets = [0, 0, 0], sizes = [1, 16, 8], strides = [1, 1, 1]} : vector<4x16x8xf32> to vector<1x16x8xf32>
    %34 = vector.shape_cast %33 : vector<1x16x8xf32> to vector<16x8xf32>
    %35 = arith.truncf %34 : vector<16x8xf32> to vector<16x8xbf16>
    %c0_16 = arith.constant 0 : index
    %c0_17 = arith.constant 0 : index
    %c0_18 = arith.constant 0 : index
    %36 = vector.load %arg4[%c0_16, %c0_17, %c0_18] : memref<4x8x32xbf16, #tpu.memory_space<vmem>>, vector<1x8x32xbf16>
    %37 = vector.shape_cast %36 : vector<1x8x32xbf16> to vector<8x32xbf16>
    %cst_19 = arith.constant dense<0.000000e+00> : vector<16x32xf32>
    %38 = tpu.matmul %35, %37, %cst_19 {dimension_numbers = #tpu.dot_dimension_numbers<[1], [0], [0], [1], [0, 0, 1, 1], [], []>} : vector<16x8xbf16>, vector<8x32xbf16>, vector<16x32xf32> -> vector<16x32xf32>
    %39 = vector.extract_strided_slice %32 {offsets = [1, 0, 0], sizes = [1, 16, 8], strides = [1, 1, 1]} : vector<4x16x8xf32> to vector<1x16x8xf32>
    %40 = vector.shape_cast %39 : vector<1x16x8xf32> to vector<16x8xf32>
    %41 = arith.truncf %40 : vector<16x8xf32> to vector<16x8xbf16>
    %c1 = arith.constant 1 : index
    %c0_20 = arith.constant 0 : index
    %c0_21 = arith.constant 0 : index
    %42 = vector.load %arg4[%c1, %c0_20, %c0_21] : memref<4x8x32xbf16, #tpu.memory_space<vmem>>, vector<1x8x32xbf16>
    %43 = vector.shape_cast %42 : vector<1x8x32xbf16> to vector<8x32xbf16>
    %cst_22 = arith.constant dense<0.000000e+00> : vector<16x32xf32>
    %44 = tpu.matmul %41, %43, %cst_22 {dimension_numbers = #tpu.dot_dimension_numbers<[1], [0], [0], [1], [0, 0, 1, 1], [], []>} : vector<16x8xbf16>, vector<8x32xbf16>, vector<16x32xf32> -> vector<16x32xf32>
    %45 = arith.addf %38, %44 : vector<16x32xf32>
    %46 = vector.extract_strided_slice %32 {offsets = [2, 0, 0], sizes = [1, 16, 8], strides = [1, 1, 1]} : vector<4x16x8xf32> to vector<1x16x8xf32>
    %47 = vector.shape_cast %46 : vector<1x16x8xf32> to vector<16x8xf32>
    %48 = arith.truncf %47 : vector<16x8xf32> to vector<16x8xbf16>
    %c2 = arith.constant 2 : index
    %c0_23 = arith.constant 0 : index
    %c0_24 = arith.constant 0 : index
    %49 = vector.load %arg4[%c2, %c0_23, %c0_24] : memref<4x8x32xbf16, #tpu.memory_space<vmem>>, vector<1x8x32xbf16>
    %50 = vector.shape_cast %49 : vector<1x8x32xbf16> to vector<8x32xbf16>
    %cst_25 = arith.constant dense<0.000000e+00> : vector<16x32xf32>
    %51 = tpu.matmul %48, %50, %cst_25 {dimension_numbers = #tpu.dot_dimension_numbers<[1], [0], [0], [1], [0, 0, 1, 1], [], []>} : vector<16x8xbf16>, vector<8x32xbf16>, vector<16x32xf32> -> vector<16x32xf32>
    %52 = arith.addf %45, %51 : vector<16x32xf32>
    %53 = vector.extract_strided_slice %32 {offsets = [3, 0, 0], sizes = [1, 16, 8], strides = [1, 1, 1]} : vector<4x16x8xf32> to vector<1x16x8xf32>
    %54 = vector.shape_cast %53 : vector<1x16x8xf32> to vector<16x8xf32>
    %55 = arith.truncf %54 : vector<16x8xf32> to vector<16x8xbf16>
    %c3 = arith.constant 3 : index
    %c0_26 = arith.constant 0 : index
    %c0_27 = arith.constant 0 : index
    %56 = vector.load %arg4[%c3, %c0_26, %c0_27] : memref<4x8x32xbf16, #tpu.memory_space<vmem>>, vector<1x8x32xbf16>
    %57 = vector.shape_cast %56 : vector<1x8x32xbf16> to vector<8x32xbf16>
    %cst_28 = arith.constant dense<0.000000e+00> : vector<16x32xf32>
    %58 = tpu.matmul %55, %57, %cst_28 {dimension_numbers = #tpu.dot_dimension_numbers<[1], [0], [0], [1], [0, 0, 1, 1], [], []>} : vector<16x8xbf16>, vector<8x32xbf16>, vector<16x32xf32> -> vector<16x32xf32>
    %59 = arith.addf %52, %58 : vector<16x32xf32>
    %c0_29 = arith.constant 0 : index
    %c0_30 = arith.constant 0 : index
    %60 = vector.load %arg5[%c0_29, %c0_30] : memref<1x32xf32, #tpu.memory_space<vmem>>, vector<1x32xf32>
    %61 = vector.broadcast %60 : vector<1x32xf32> to vector<16x32xf32>
    %62 = arith.addf %59, %61 : vector<16x32xf32>
    %c0_31 = arith.constant 0 : index
    %c0_32 = arith.constant 0 : index
    %c0_33 = arith.constant 0 : index
    %63 = vector.load %arg6[%c0_31, %c0_32, %c0_33] : memref<1x16x32xf32, #tpu.memory_space<vmem>>, vector<1x16x32xf32>
    %64 = vector.shape_cast %63 : vector<1x16x32xf32> to vector<16x32xf32>
    %65 = vector.shape_cast %62 : vector<16x32xf32> to vector<1x16x32xf32>
    tpu.vector_store %arg6[%c0_31, %c0_32, %c0_33], %65 {strides = array<i32>} : memref<1x16x32xf32, #tpu.memory_space<vmem>>, vector<1x16x32xf32>,
    return
  }
  func.func @transform_0(%arg0: i32, %arg1: i32) -> (i32, i32, i32) {
    %c0_i32 = arith.constant 0 : i32
    %c0_i32_0 = arith.constant 0 : i32
    %c0_i32_1 = arith.constant 0 : i32
    return %arg0, %c0_i32, %c0_i32_0 : i32, i32, i32
  }
  func.func @transform_1(%arg0: i32, %arg1: i32) -> (i32, i32, i32) {
    %c0_i32 = arith.constant 0 : i32
    %c0_i32_0 = arith.constant 0 : i32
    %c0_i32_1 = arith.constant 0 : i32
    %c0_i32_2 = arith.constant 0 : i32
    return %c0_i32, %c0_i32_0, %c0_i32_1 : i32, i32, i32
  }
  func.func @transform_2(%arg0: i32, %arg1: i32) -> (i32, i32, i32) {
    %c0_i32 = arith.constant 0 : i32
    %c0_i32_0 = arith.constant 0 : i32
    %c0_i32_1 = arith.constant 0 : i32
    %c0_i32_2 = arith.constant 0 : i32
    return %c0_i32, %c0_i32_0, %c0_i32_1 : i32, i32, i32
  }
  func.func @transform_3(%arg0: i32, %arg1: i32) -> (i32, i32) {
    %c0_i32 = arith.constant 0 : i32
    %c0_i32_0 = arith.constant 0 : i32
    %c0_i32_1 = arith.constant 0 : i32
    return %c0_i32, %c0_i32_0 : i32, i32
  }
  func.func @transform_4(%arg0: i32, %arg1: i32) -> (i32, i32, i32) {
    %c0_i32 = arith.constant 0 : i32
    %c0_i32_0 = arith.constant 0 : i32
    return %arg0, %arg1, %c0_i32 : i32, i32, i32
  }
}

</mosaic_0001>

<llo_original>
// kernel: tpu_custom_call.1
$region0: #{tpu_custom_call.1}
  #allocation0 [shape = 'u32[]', space=smem, size = 0x4, offset = 0x4, fixed_abs, tag = 'smem constant byte address 0x4 - core index']
  #allocation1 [shape = 'u32[144,128]{1,0:T(1,128)}', space=vmem, size = 0x12000, scoped, tag = 'internal scratch']
  #allocation2 [shape = 'bf16[4,16,8]{2,1,0:T(16,128)(2,1)}', space=vmem, size = 0x4000, scoped, tag = 'scratch operand']
  #allocation3 [shape = 'bf16[4,16,8]{2,1,0:T(16,128)(2,1)}', space=vmem, size = 0x4000, scoped, tag = 'scratch operand']
  %s0 = inlined_call_operand.hbm [shape: bf16[2,16,32], index: 0, kind: input, shape index: {}]
  %s1 = inlined_call_operand.hbm [shape: bf16[3,32,32], index: 1, kind: input, shape index: {}]
  %s2 = inlined_call_operand.hbm [shape: bf16[4,8,32], index: 2, kind: input, shape index: {}]
  %s3 = inlined_call_operand.vmem [shape: f32[1,32], index: 3, kind: input, shape index: {}]
  %s4 = inlined_call_operand.hbm [shape: f32[2,16,32], index: 4, kind: output, shape index: {}]
  %s5 = sld [smem:[#allocation0]]
  $region65: #{tpu_custom_call.1} parent=0
    _
  %s7 = ssub.s32 1, %s5
  %s8 = scalar_select 0, %s7, %s5
  $region1: #{tpu_custom_call.1} parent=0
    #allocation4 [shape = 'u8[8192]{0}', space=vmem, size = 0x2000, scoped, tag = 'input window, operand 0']
    #allocation5 [shape = 's32[2]{0}', space=sflag, size = 0x8, scoped, tag = 'scoped memory for tpu_custom_call.1']
    #allocation6 [shape = 's32[2]{0}', space=sflag, size = 0x8, scoped, tag = 'scoped memory for tpu_custom_call.1']
    #allocation7 [shape = 'u8[24576]{0}', space=vmem, size = 0x6000, scoped, tag = 'input window, operand 1, single buffered']
    #allocation8 [shape = 's32[1]{0}', space=sflag, size = 0x4, scoped, tag = 'scoped memory for tpu_custom_call.1']
    #allocation9 [shape = 'u8[8192]{0}', space=vmem, size = 0x2000, scoped, tag = 'input window, operand 2, single buffered']
    #allocation10 [shape = 'u8[16384]{0}', space=vmem, size = 0x4000, scoped, tag = 'output window, operand 0']
    %9 = vsyncpa [#allocation5], 0
    %s10 = scalar_lea.sflag [#allocation5], 1
    %11 = vsyncpa %s10, 0
    %12 = vsyncpa [#allocation8], 0
    %13 = vsyncpa [#allocation6], 0
    %s14 = scalar_lea.sflag [#allocation6], 1
    %15 = vsyncpa %s14, 0
    loop: start=0, step=1, limit=4
    $region2: #{tpu_custom_call.1} parent=1 // loop_pre_header
      _
    $region3: #{tpu_custom_call.1} parent=1 // loop_header
      %s17 = sphi 0, %s21
      %p18 = scmp.ge.s32.totalorder %s17, 4
      %s24 = sphi 0, %s36
      %s25 = sphi 0, %s32
      %s26 = sphi 0, %s24
      %s27 = sphi 0, %s25
      %s28 = sphi 0, %s26
      %s29 = sphi 0, %s27
      %s39 = sphi 0, %s41
      %s42 = sphi 0, %s39
      %s43 = sphi 0, %s42
      %s59 = sphi 0, %s43
      %s63 = sphi 0, %s63
      %s65 = sphi 0, %s63
      %s66 = sphi 0, %s65
      %s80 = sphi 0, %s66
      %s84 = sphi 0, %s84
      %s86 = sphi 0, %s84
      %s87 = sphi 0, %s86
      %s101 = sphi 0, %s87
      %s105 = sphi 0, %s105
      %s107 = sphi 0, %s105
      %s108 = sphi 0, %s107
      %s122 = sphi 0, %s108
      %s130 = sphi 0, %s132
      %s133 = sphi 0, %s130
      %s134 = sphi 0, %s133
      %s150 = sphi 0, %s134
    $region4: #{tpu_custom_call.1} parent=1 // loop_header_branch
      %20 = sbr.rel (%p18) target = $region8
    $region5: #{tpu_custom_call.1} parent=1 // loop_body
      %s22 = ssub.s32 %s17, 1
      %s23 = ssub.s32 %s17, 2
      %s30 = sadd.s32 1, %s25
      %p31 = scmp.ge.s32.totalorder %s30, 1
      %s32 = scalar_select %p31, 0, %s30
      %s33 = sadd.s32 1, %s24
      %s34 = scalar_select %p31, %s33, %s24
      %p35 = scmp.ge.s32.totalorder %s34, 2
      %s36 = scalar_select %p35, 0, %s34
      %s37 = ssub.s32 %s24, %s36
      %p38 = scmp.eq.s32.totalorder %s37, 0
      %s40 = sadd.s32 %s39, 1
      %s41 = scalar_select %p38, %s39, %s40
      %p44 = pneg %p38
      %p45 = scmp.eq.s32.totalorder %s17, 1
      %p46 = por %p44, %p45
      %p47 = scmp.ne.s32.totalorder %s39, %s42
      %p48 = scmp.eq.s32.totalorder %s17, 0
      %p49 = por %p47, %p48
      %p50 = scmp.ne.s32.totalorder %s39, %s42
      %p51 = scmp.eq.s32.totalorder %s22, 1
      %p52 = por %p50, %p51
      %p53 = scmp.ne.s32.totalorder %s42, %s43
      %p54 = scmp.eq.s32.totalorder %s22, 0
      %p55 = por %p53, %p54
      %p56 = scmp.ne.s32.totalorder %s42, %s43
      %p57 = scmp.eq.s32.totalorder %s23, 1
      %p58 = por %p56, %p57
      %p60 = scmp.ne.s32.totalorder %s43, %s59
      %p61 = scmp.eq.s32.totalorder %s23, 0
      %p62 = por %p60, %p61
      %s64 = sadd.s32 %s63, 1
      %p67 = scmp.eq.s32.totalorder %s17, 1
      %p68 = scmp.ne.s32.totalorder %s63, %s65
      %p69 = scmp.eq.s32.totalorder %s17, 0
      %p70 = por %p68, %p69
      %p71 = scmp.ne.s32.totalorder %s63, %s65
      %p72 = scmp.eq.s32.totalorder %s22, 1
      %p73 = por %p71, %p72
      %p74 = scmp.ne.s32.totalorder %s65, %s66
      %p75 = scmp.eq.s32.totalorder %s22, 0
      %p76 = por %p74, %p75
      %p77 = scmp.ne.s32.totalorder %s65, %s66
      %p78 = scmp.eq.s32.totalorder %s23, 1
      %p79 = por %p77, %p78
      %p81 = scmp.ne.s32.totalorder %s66, %s80
      %p82 = scmp.eq.s32.totalorder %s23, 0
      %p83 = por %p81, %p82
      %s85 = sadd.s32 %s84, 1
      %p88 = scmp.eq.s32.totalorder %s17, 1
      %p89 = scmp.ne.s32.totalorder %s84, %s86
      %p90 = scmp.eq.s32.totalorder %s17, 0
      %p91 = por %p89, %p90
      %p92 = scmp.ne.s32.totalorder %s84, %s86
      %p93 = scmp.eq.s32.totalorder %s22, 1
      %p94 = por %p92, %p93
      %p95 = scmp.ne.s32.totalorder %s86, %s87
      %p96 = scmp.eq.s32.totalorder %s22, 0
      %p97 = por %p95, %p96
      %p98 = scmp.ne.s32.totalorder %s86, %s87
      %p99 = scmp.eq.s32.totalorder %s23, 1
      %p100 = por %p98, %p99
      %p102 = scmp.ne.s32.totalorder %s87, %s101
      %p103 = scmp.eq.s32.totalorder %s23, 0
      %p104 = por %p102, %p103
      %s106 = sadd.s32 %s105, 1
      %p109 = scmp.eq.s32.totalorder %s17, 1
      %p110 = scmp.ne.s32.totalorder %s105, %s107
      %p111 = scmp.eq.s32.totalorder %s17, 0
      %p112 = por %p110, %p111
      %p113 = scmp.ne.s32.totalorder %s105, %s107
      %p114 = scmp.eq.s32.totalorder %s22, 1
      %p115 = por %p113, %p114
      %p116 = scmp.ne.s32.totalorder %s107, %s108
      %p117 = scmp.eq.s32.totalorder %s22, 0
      %p118 = por %p116, %p117
      %p119 = scmp.ne.s32.totalorder %s107, %s108
      %p120 = scmp.eq.s32.totalorder %s23, 1
      %p121 = por %p119, %p120
      %p123 = scmp.ne.s32.totalorder %s108, %s122
      %p124 = scmp.eq.s32.totalorder %s23, 0
      %p125 = por %p123, %p124
      %s126 = ssub.s32 %s24, %s36
      %s127 = ssub.s32 %s25, %s32
      %s128 = sor.u32 %s126, %s127
      %p129 = scmp.eq.s32.totalorder %s128, 0
      %s131 = sadd.s32 %s130, 1
      %s132 = scalar_select %p129, %s130, %s131
      %p135 = pneg %p129
      %p136 = scmp.eq.s32.totalorder %s17, 1
      %p137 = por %p135, %p136
      %p138 = scmp.ne.s32.totalorder %s130, %s133
      %p139 = scmp.eq.s32.totalorder %s17, 0
      %p140 = por %p138, %p139
      %p141 = scmp.ne.s32.totalorder %s130, %s133
      %p142 = scmp.eq.s32.totalorder %s22, 1
      %p143 = por %p141, %p142
      %p144 = scmp.ne.s32.totalorder %s133, %s134
      %p145 = scmp.eq.s32.totalorder %s22, 0
      %p146 = por %p144, %p145
      %p147 = scmp.ne.s32.totalorder %s133, %s134
      %p148 = scmp.eq.s32.totalorder %s23, 1
      %p149 = por %p147, %p148
      %p151 = scmp.ne.s32.totalorder %s134, %s150
      %p152 = scmp.eq.s32.totalorder %s23, 0
      %p153 = por %p151, %p152
      %p154 = scmp.le.s32.totalorder 1, %s17
      %p155 = scmp.lt.s32.totalorder %s17, 3
      %p156 = pnand %p154, %p155
      %p157 = pneg %p156
      // Predicated region
      $region9: #{tpu_custom_call.1} parent=5 // pred_check
        _
      $region10: #{tpu_custom_call.1} parent=5 // pred_check_branch
        %159 = sbr.rel (%p156) target = $region12
      $region11: #{tpu_custom_call.1} parent=5 // pred_region
        %s160 = ssub.s32 %s17, 1
        // Predicated region
        $region13: #{tpu_custom_call.1} parent=11 // pred_check
          %p161 = pneg %p76
        $region14: #{tpu_custom_call.1} parent=11 // pred_check_branch
          %163 = sbr.rel (%p161) target = $region16
        $region15: #{tpu_custom_call.1} parent=11 // pred_region
          %s165 = ssub.s32 768, 768
          %166 = vsyncadd [#allocation8], %s165
          %s167 = sshll.u32 [#allocation7], 4
          %s168 = int_to_ptr.vmem [resolvable:$true] %s167
          %173 = dma.hbm_to_vmem [thread:$0]  %s1, 768, %s168, [#allocation8], 64, 64, 4
        $region16: #{tpu_custom_call.1} parent=11 // pred_fallthru
          _
        // Predicated region
        $region17: #{tpu_custom_call.1} parent=11 // pred_check
          %p174 = pneg %p97
        $region18: #{tpu_custom_call.1} parent=11 // pred_check_branch
          %176 = sbr.rel (%p174) target = $region20
        $region19: #{tpu_custom_call.1} parent=11 // pred_region
          %s178 = ssub.s32 256, 256
          %179 = vsyncadd [#allocation8], %s178
          %s180 = sshll.u32 [#allocation9], 4
          %s181 = int_to_ptr.vmem [resolvable:$true] %s180
          %186 = dma.hbm_to_vmem [thread:$0]  %s2, 256, %s181, [#allocation8], 64, 64, 4
        $region20: #{tpu_custom_call.1} parent=11 // pred_fallthru
          _
        // Predicated region
        $region21: #{tpu_custom_call.1} parent=11 // pred_check
          %p187 = pneg %p118
        $region22: #{tpu_custom_call.1} parent=11 // pred_check_branch
          %189 = sbr.rel (%p187) target = $region24
        $region23: #{tpu_custom_call.1} parent=11 // pred_region
          _
        $region24: #{tpu_custom_call.1} parent=11 // pred_fallthru
          _
      $region12: #{tpu_custom_call.1} parent=5 // pred_fallthru
        _
      %p190 = scmp.lt.s32.totalorder %s17, 2
      // Predicated region
      $region25: #{tpu_custom_call.1} parent=5 // pred_check
        %p191 = pneg %p190
      $region26: #{tpu_custom_call.1} parent=5 // pred_check_branch
        %193 = sbr.rel (%p191) target = $region28
      $region27: #{tpu_custom_call.1} parent=5 // pred_region
        // Predicated region
        $region29: #{tpu_custom_call.1} parent=27 // pred_check
          %p194 = pneg %p49
        $region30: #{tpu_custom_call.1} parent=27 // pred_check_branch
          %196 = sbr.rel (%p194) target = $region32
        $region31: #{tpu_custom_call.1} parent=27 // pred_region
          %s197 = sand.u32 %s39, 1
          %s198 = scalar_lea.sflag [#allocation5], %s197
          %s199 = sand.u32 %s39, 1
          %s200 = smul.addr %s199, 8
          %s201 = scalar_lea.vmem [#allocation4], %s200
          %s203 = ssub.s32 128, 128
          %204 = vsyncadd %s198, %s203
          %s205 = smul.addr %s24, 2
          %s206 = smul.addr %s205, 64
          %s207 = scalar_lea.hbm %s0, %s206
          %s208 = sshll.u32 %s201, 4
          %s209 = int_to_ptr.vmem [resolvable:$true] %s208
          %214 = dma.hbm_to_vmem [thread:$0]  %s207, 128, %s209, %s198, 64, 64, 4
        $region32: #{tpu_custom_call.1} parent=27 // pred_fallthru
          _
      $region28: #{tpu_custom_call.1} parent=5 // pred_fallthru
        _
      %p215 = scmp.le.s32.totalorder 1, %s17
      %p216 = scmp.lt.s32.totalorder %s17, 3
      %p217 = pnand %p215, %p216
      %p218 = pneg %p217
      // Predicated region
      $region33: #{tpu_custom_call.1} parent=5 // pred_check
        _
      $region34: #{tpu_custom_call.1} parent=5 // pred_check_branch
        %220 = sbr.rel (%p217) target = $region36
      $region35: #{tpu_custom_call.1} parent=5 // pred_region
        %s221 = ssub.s32 %s17, 1
        %s222 = sand.u32 %s42, 1
        %s223 = scalar_lea.sflag [#allocation5], %s222
        %s224 = sand.u32 %s42, 1
        %s225 = smul.addr %s224, 8
        %s226 = scalar_lea.vmem [#allocation4], %s225
        // Predicated region
        $region37: #{tpu_custom_call.1} parent=35 // pred_check
          %p227 = pneg %p55
        $region38: #{tpu_custom_call.1} parent=35 // pred_check_branch
          %229 = sbr.rel (%p227) target = $region40
        $region39: #{tpu_custom_call.1} parent=35 // pred_region
          %230 = dma.done %s223, 128
        $region40: #{tpu_custom_call.1} parent=35 // pred_fallthru
          _
        // Predicated region
        $region41: #{tpu_custom_call.1} parent=35 // pred_check
          %p231 = pneg %p76
        $region42: #{tpu_custom_call.1} parent=35 // pred_check_branch
          %233 = sbr.rel (%p231) target = $region44
        $region43: #{tpu_custom_call.1} parent=35 // pred_region
          %234 = dma.done [#allocation8], 768
        $region44: #{tpu_custom_call.1} parent=35 // pred_fallthru
          _
        // Predicated region
        $region45: #{tpu_custom_call.1} parent=35 // pred_check
          %p235 = pneg %p97
        $region46: #{tpu_custom_call.1} parent=35 // pred_check_branch
          %237 = sbr.rel (%p235) target = $region48
        $region47: #{tpu_custom_call.1} parent=35 // pred_region
          %238 = dma.done [#allocation8], 256
        $region48: #{tpu_custom_call.1} parent=35 // pred_fallthru
          _
        %s239 = sand.u32 %s42, 1
        %s240 = scalar_lea.sflag [#allocation5], %s239
        %s241 = sand.u32 %s42, 1
        %s242 = smul.addr %s241, 8
        %s243 = scalar_lea.vmem [#allocation4], %s242
        %p244 = pneg %p55
        %p245 = pneg %p52
        %p246 = pneg %p76
        %p247 = pneg %p73
        %p248 = pneg %p97
        %p249 = pneg %p94
        %p250 = pneg %p118
        %p251 = pneg %p115
        %p252 = pneg %p146
        %p253 = pneg %p143
        %s254 = sand.u32 %s133, 1
        %s255 = scalar_lea.sflag [#allocation6], %s254
        %s256 = sand.u32 %s133, 1
        %s257 = smul.addr %s256, 16
        %s258 = scalar_lea.vmem [#allocation10], %s257
        %s259 = smul.u32 2, %s27
        %p261 = scmp.eq.s32.totalorder %s27, 0
        // Predicated region
        $region49: #{tpu_custom_call.1} parent=35 // pred_check
          %p262 = pneg %p261
        $region50: #{tpu_custom_call.1} parent=35 // pred_check_branch
          %264 = sbr.rel (%p262) target = $region52
        $region51: #{tpu_custom_call.1} parent=35 // pred_region
          %v265 = vld [vmem:[%s226] sm:$0xf]
          %v266 = vld [vmem:[%s226 + $0x4] sm:$0xf]
          %s267 = scalar_lea.vmem [#allocation7], 16
          %v268 = vld [vmem:[%s267] sm:$0xf]
          %v269 = vld [vmem:[%s267 + $0x4] sm:$0xf]
          %v270 = vld [vmem:[%s267 + $0x8] sm:$0xf]
          %v271 = vld [vmem:[%s267 + $0xc] sm:$0xf]
          %v274 = vunpack.c.l.b16 %v265
          %v275 = vunpack.c.l.b16 %v266
          %v276 = vpack.c.b16 %v275, %v274
          %v281 = vunpack.c.l.b16 %v268
          %v282 = vunpack.c.l.b16 %v269
          %v283 = vunpack.c.l.b16 %v270
          %v284 = vunpack.c.l.b16 %v271
          %v285 = vpack.c.b16 %v282, %v281
          %v286 = vpack.c.b16 %v284, %v283
          %vm289 = vcmask 261120
          %v291 = vsel %vm289, %v276, 0
          %293 = vmatprep.subr.bf16.mxu0 0
          %294 = vmatpush1.bf16.msra.mxu0 %v285
          %295 = vmatprep.subr.bf16.mxu0 0
          %296 = vmatpush1.bf16.msra.mxu0 %v286
          %297 = vmatprep.subr.bf16.mxu0 0
          %298 = vmatpush1.bf16.msra.mxu0 0
          %299 = vmatprep.subr.bf16.mxu0 0
          %300 = vmatpush1.bf16.msra.mxu0 0
          %301 = vmatprep.subr.bf16.mxu0 0
          %302 = vmatpush1.bf16.msra.mxu0 0
          %303 = vmatprep.subr.bf16.mxu0 0
          %304 = vmatpush1.bf16.msra.mxu0 0
          %305 = vmatprep.subr.bf16.mxu0 0
          %306 = vmatpush1.bf16.msra.mxu0 0
          %307 = vmatprep.subr.bf16.mxu0 0
          %308 = vmatpush1.bf16.msra.mxu0 0
          %309 = vmatprep.subr.bf16.mxu0 0
          %310 = vmatpush1.bf16.msra.mxu0 0
          %311 = vmatprep.subr.bf16.mxu0 0
          %312 = vmatpush1.bf16.msra.mxu0 0
          %313 = vmatprep.subr.bf16.mxu0 0
          %314 = vmatpush1.bf16.msra.mxu0 0
          %315 = vmatprep.subr.bf16.mxu0 0
          %316 = vmatpush1.bf16.msra.mxu0 0
          %317 = vmatprep.subr.bf16.mxu0 0
          %318 = vmatpush1.bf16.msra.mxu0 0
          %319 = vmatprep.subr.bf16.mxu0 0
          %320 = vmatpush1.bf16.msra.mxu0 0
          %321 = vmatprep.subr.bf16.mxu0 0
          %322 = vmatpush1.bf16.msra.mxu0 0
          %323 = vmatprep.subr.bf16.mxu0 0
          %324 = vmatpush1.bf16.msra.mxu0 0
          %325 = vmatprep.mubr.bf16.mxu0 0
          %326 = vmatmul.mubr.bf16.gmra.mrb[0].mxu0 %v291
          %v327 = vpop.f32.mrb[0].mxu0
          %v328 = vadd.f32 0.0, %v327
          %v329 = vpop.f32.mrb[0].mxu0
          %v330 = vpop.f32.mrb[0].mxu0
          %v331 = vadd.f32 0.0, %v330
          %v332 = vpop.f32.mrb[0].mxu0
          %333 = vdwg.mxu0
          %s334 = scalar_lea.vmem [#allocation7], 32
          %v335 = vld [vmem:[%s334] sm:$0xf]
          %v336 = vld [vmem:[%s334 + $0x4] sm:$0xf]
          %v337 = vld [vmem:[%s334 + $0x8] sm:$0xf]
          %v338 = vld [vmem:[%s334 + $0xc] sm:$0xf]
          %v343 = vunpack.c.l.b16 %v335
          %v344 = vunpack.c.l.b16 %v336
          %v345 = vunpack.c.l.b16 %v337
          %v346 = vunpack.c.l.b16 %v338
          %v347 = vpack.c.b16 %v344, %v343
          %v348 = vpack.c.b16 %v346, %v345
          %351 = vmatprep.subr.bf16.mxu0 0
          %352 = vmatpush1.bf16.msra.mxu0 %v347
          %353 = vmatprep.subr.bf16.mxu0 0
          %354 = vmatpush1.bf16.msra.mxu0 %v348
          %355 = vmatprep.subr.bf16.mxu0 0
          %356 = vmatpush1.bf16.msra.mxu0 0
          %357 = vmatprep.subr.bf16.mxu0 0
          %358 = vmatpush1.bf16.msra.mxu0 0
          %359 = vmatprep.subr.bf16.mxu0 0
          %360 = vmatpush1.bf16.msra.mxu0 0
          %361 = vmatprep.subr.bf16.mxu0 0
          %362 = vmatpush1.bf16.msra.mxu0 0
          %363 = vmatprep.subr.bf16.mxu0 0
          %364 = vmatpush1.bf16.msra.mxu0 0
          %365 = vmatprep.subr.bf16.mxu0 0
          %366 = vmatpush1.bf16.msra.mxu0 0
          %367 = vmatprep.subr.bf16.mxu0 0
          %368 = vmatpush1.bf16.msra.mxu0 0
          %369 = vmatprep.subr.bf16.mxu0 0
          %370 = vmatpush1.bf16.msra.mxu0 0
          %371 = vmatprep.subr.bf16.mxu0 0
          %372 = vmatpush1.bf16.msra.mxu0 0
          %373 = vmatprep.subr.bf16.mxu0 0
          %374 = vmatpush1.bf16.msra.mxu0 0
          %375 = vmatprep.subr.bf16.mxu0 0
          %376 = vmatpush1.bf16.msra.mxu0 0
          %377 = vmatprep.subr.bf16.mxu0 0
          %378 = vmatpush1.bf16.msra.mxu0 0
          %379 = vmatprep.subr.bf16.mxu0 0
          %380 = vmatpush1.bf16.msra.mxu0 0
          %381 = vmatprep.subr.bf16.mxu0 0
          %382 = vmatpush1.bf16.msra.mxu0 0
          %383 = vmatprep.mubr.bf16.mxu0 0
          %384 = vmatmul.mubr.bf16.gmra.mrb[0].mxu0 %v291
          %v385 = vpop.f32.mrb[0].mxu0
          %v386 = vadd.f32 0.0, %v385
          %v387 = vpop.f32.mrb[0].mxu0
          %v388 = vpop.f32.mrb[0].mxu0
          %v389 = vadd.f32 0.0, %v388
          %v390 = vpop.f32.mrb[0].mxu0
          %391 = vdwg.mxu0
          %394 = vrot.lane.b32.xlu0 %v328, 120
          %v395 = vpop.permute.xlu0 %394
          %396 = vrot.lane.b32.xlu0 %v331, 120
          %v397 = vpop.permute.xlu0 %396
          %400 = vrot.lane.b32.xlu0 %v328, 112
          %v401 = vpop.permute.xlu0 %400
          %402 = vrot.lane.b32.xlu0 %v331, 112
          %v403 = vpop.permute.xlu0 %402
          %406 = vrot.lane.b32.xlu0 %v328, 104
          %v407 = vpop.permute.xlu0 %406
          %408 = vrot.lane.b32.xlu0 %v331, 104
          %v409 = vpop.permute.xlu0 %408
          %v412 = vpack.c.bf16 %v331, %v328
          %v413 = vpack.c.bf16 %v397, %v395
          %v414 = vpack.c.bf16 %v403, %v401
          %v415 = vpack.c.bf16 %v409, %v407
          %vm416 = vcmask 64512
          %417 = vst.msk [vmem:[#allocation2] sm:$0xff] %vm416, %v412
          %418 = vst.msk [vmem:[#allocation2 + $0x8] sm:$0xff] %vm416, %v413
          %419 = vst.msk [vmem:[#allocation2 + $0x10] sm:$0xff] %vm416, %v414
          %420 = vst.msk [vmem:[#allocation2 + $0x18] sm:$0xff] %vm416, %v415
          %423 = vrot.lane.b32.xlu0 %v386, 120
          %v424 = vpop.permute.xlu0 %423
          %425 = vrot.lane.b32.xlu0 %v389, 120
          %v426 = vpop.permute.xlu0 %425
          %429 = vrot.lane.b32.xlu0 %v386, 112
          %v430 = vpop.permute.xlu0 %429
          %431 = vrot.lane.b32.xlu0 %v389, 112
          %v432 = vpop.permute.xlu0 %431
          %435 = vrot.lane.b32.xlu0 %v386, 104
          %v436 = vpop.permute.xlu0 %435
          %437 = vrot.lane.b32.xlu0 %v389, 104
          %v438 = vpop.permute.xlu0 %437
          %v441 = vpack.c.bf16 %v389, %v386
          %v442 = vpack.c.bf16 %v426, %v424
          %v443 = vpack.c.bf16 %v432, %v430
          %v444 = vpack.c.bf16 %v438, %v436
          %445 = vst.msk [vmem:[#allocation3] sm:$0xff] %vm416, %v441
          %446 = vst.msk [vmem:[#allocation3 + $0x8] sm:$0xff] %vm416, %v442
          %447 = vst.msk [vmem:[#allocation3 + $0x10] sm:$0xff] %vm416, %v443
          %448 = vst.msk [vmem:[#allocation3 + $0x18] sm:$0xff] %vm416, %v444
        $region52: #{tpu_custom_call.1} parent=35 // pred_fallthru
          _
        %v449 = vld [vmem:[%s226] sm:$0xf]
        %v450 = vld [vmem:[%s226 + $0x4] sm:$0xf]
        %v451 = vld [vmem:[#allocation7] sm:$0xf]
        %v452 = vld [vmem:[#allocation7 + $0x4] sm:$0xf]
        %v453 = vld [vmem:[#allocation7 + $0x8] sm:$0xf]
        %v454 = vld [vmem:[#allocation7 + $0xc] sm:$0xf]
        %v457 = vunpack.c.l.b16 %v449
        %v458 = vunpack.c.l.b16 %v450
        %v459 = vpack.c.b16 %v458, %v457
        %v464 = vunpack.c.l.b16 %v451
        %v465 = vunpack.c.l.b16 %v452
        %v466 = vunpack.c.l.b16 %v453
        %v467 = vunpack.c.l.b16 %v454
        %v468 = vpack.c.b16 %v465, %v464
        %v469 = vpack.c.b16 %v467, %v466
        %vm472 = vcmask 261120
        %v474 = vsel %vm472, %v459, 0
        %476 = vmatprep.subr.bf16.mxu0 0
        %477 = vmatpush1.bf16.msra.mxu0 %v468
        %478 = vmatprep.subr.bf16.mxu0 0
        %479 = vmatpush1.bf16.msra.mxu0 %v469
        %480 = vmatprep.subr.bf16.mxu0 0
        %481 = vmatpush1.bf16.msra.mxu0 0
        %482 = vmatprep.subr.bf16.mxu0 0
        %483 = vmatpush1.bf16.msra.mxu0 0
        %484 = vmatprep.subr.bf16.mxu0 0
        %485 = vmatpush1.bf16.msra.mxu0 0
        %486 = vmatprep.subr.bf16.mxu0 0
        %487 = vmatpush1.bf16.msra.mxu0 0
        %488 = vmatprep.subr.bf16.mxu0 0
        %489 = vmatpush1.bf16.msra.mxu0 0
        %490 = vmatprep.subr.bf16.mxu0 0
        %491 = vmatpush1.bf16.msra.mxu0 0
        %492 = vmatprep.subr.bf16.mxu0 0
        %493 = vmatpush1.bf16.msra.mxu0 0
        %494 = vmatprep.subr.bf16.mxu0 0
        %495 = vmatpush1.bf16.msra.mxu0 0
        %496 = vmatprep.subr.bf16.mxu0 0
        %497 = vmatpush1.bf16.msra.mxu0 0
        %498 = vmatprep.subr.bf16.mxu0 0
        %499 = vmatpush1.bf16.msra.mxu0 0
        %500 = vmatprep.subr.bf16.mxu0 0
        %501 = vmatpush1.bf16.msra.mxu0 0
        %502 = vmatprep.subr.bf16.mxu0 0
        %503 = vmatpush1.bf16.msra.mxu0 0
        %504 = vmatprep.subr.bf16.mxu0 0
        %505 = vmatpush1.bf16.msra.mxu0 0
        %506 = vmatprep.subr.bf16.mxu0 0
        %507 = vmatpush1.bf16.msra.mxu0 0
        %508 = vmatprep.mubr.bf16.mxu0 0
        %509 = vmatmul.mubr.bf16.gmra.mrb[0].mxu0 %v474
        %v510 = vpop.f32.mrb[0].mxu0
        %v511 = vadd.f32 0.0, %v510
        %v512 = vpop.f32.mrb[0].mxu0
        %v513 = vpop.f32.mrb[0].mxu0
        %v514 = vadd.f32 0.0, %v513
        %v515 = vpop.f32.mrb[0].mxu0
        %516 = vdwg.mxu0
        %519 = vrot.lane.b32.xlu0 %v511, 120
        %v520 = vpop.permute.xlu0 %519
        %521 = vrot.lane.b32.xlu0 %v514, 120
        %v522 = vpop.permute.xlu0 %521
        %525 = vrot.lane.b32.xlu0 %v511, 112
        %v526 = vpop.permute.xlu0 %525
        %527 = vrot.lane.b32.xlu0 %v514, 112
        %v528 = vpop.permute.xlu0 %527
        %531 = vrot.lane.b32.xlu0 %v511, 104
        %v532 = vpop.permute.xlu0 %531
        %533 = vrot.lane.b32.xlu0 %v514, 104
        %v534 = vpop.permute.xlu0 %533
        %v537 = vpack.c.bf16 %v514, %v511
        %v538 = vpack.c.bf16 %v522, %v520
        %v539 = vpack.c.bf16 %v528, %v526
        %v540 = vpack.c.bf16 %v534, %v532
        %v541 = vld [vmem:[#allocation2] sm:$0xff]
        %v542 = vld [vmem:[#allocation2 + $0x8] sm:$0xff]
        %v543 = vld [vmem:[#allocation2 + $0x10] sm:$0xff]
        %v544 = vld [vmem:[#allocation2 + $0x18] sm:$0xff]
        %v545 = vld [vmem:[#allocation3] sm:$0xff]
        %v546 = vld [vmem:[#allocation3 + $0x8] sm:$0xff]
        %v547 = vld [vmem:[#allocation3 + $0x10] sm:$0xff]
        %v548 = vld [vmem:[#allocation3 + $0x18] sm:$0xff]
        %vm549 = vcmask 64512
        %v551 = vsel %vm549, %v537, 0
        %v554 = vsel %vm549, %v541, 0
        %556 = vmatprep.subr.bf16.mxu0 0
        %557 = vmatpush1.bf16.xpose.msra.mxu0 %v554
        %558 = vmatprep.subr.bf16.mxu0 0
        %559 = vmatpush1.bf16.xpose.msra.mxu0 0
        %560 = vmatprep.subr.bf16.mxu0 0
        %561 = vmatpush1.bf16.xpose.msra.mxu0 0
        %562 = vmatprep.subr.bf16.mxu0 0
        %563 = vmatpush1.bf16.xpose.msra.mxu0 0
        %564 = vmatprep.subr.bf16.mxu0 0
        %565 = vmatpush1.bf16.xpose.msra.mxu0 0
        %566 = vmatprep.subr.bf16.mxu0 0
        %567 = vmatpush1.bf16.xpose.msra.mxu0 0
        %568 = vmatprep.subr.bf16.mxu0 0
        %569 = vmatpush1.bf16.xpose.msra.mxu0 0
        %570 = vmatprep.subr.bf16.mxu0 0
        %571 = vmatpush1.bf16.xpose.msra.mxu0 0
        %572 = vmatprep.subr.bf16.mxu0 0
        %573 = vmatpush1.bf16.xpose.msra.mxu0 0
        %574 = vmatprep.subr.bf16.mxu0 0
        %575 = vmatpush1.bf16.xpose.msra.mxu0 0
        %576 = vmatprep.subr.bf16.mxu0 0
        %577 = vmatpush1.bf16.xpose.msra.mxu0 0
        %578 = vmatprep.subr.bf16.mxu0 0
        %579 = vmatpush1.bf16.xpose.msra.mxu0 0
        %580 = vmatprep.subr.bf16.mxu0 0
        %581 = vmatpush1.bf16.xpose.msra.mxu0 0
        %582 = vmatprep.subr.bf16.mxu0 0
        %583 = vmatpush1.bf16.xpose.msra.mxu0 0
        %584 = vmatprep.subr.bf16.mxu0 0
        %585 = vmatpush1.bf16.xpose.msra.mxu0 0
        %586 = vmatprep.subr.bf16.mxu0 0
        %587 = vmatpush1.bf16.xpose.msra.mxu0 0
        %588 = vmatprep.mubr.bf16.mxu0 0
        %589 = vmatmul.mubr.bf16.gmra.mrb[0].mxu0 %v551
        %v590 = vpop.f32.mrb[0].mxu0
        %v591 = vadd.f32 0.0, %v590
        %v592 = vpop.f32.mrb[0].mxu0
        %v593 = vpop.f32.mrb[0].mxu0
        %v594 = vadd.f32 0.0, %v593
        %v595 = vpop.f32.mrb[0].mxu0
        %596 = vdwg.mxu0
        %v598 = vsel %vm549, %v538, 0
        %v601 = vsel %vm549, %v542, 0
        %603 = vmatprep.subr.bf16.mxu0 0
        %604 = vmatpush1.bf16.xpose.msra.mxu0 %v601
        %605 = vmatprep.subr.bf16.mxu0 0
        %606 = vmatpush1.bf16.xpose.msra.mxu0 0
        %607 = vmatprep.subr.bf16.mxu0 0
        %608 = vmatpush1.bf16.xpose.msra.mxu0 0
        %609 = vmatprep.subr.bf16.mxu0 0
        %610 = vmatpush1.bf16.xpose.msra.mxu0 0
        %611 = vmatprep.subr.bf16.mxu0 0
        %612 = vmatpush1.bf16.xpose.msra.mxu0 0
        %613 = vmatprep.subr.bf16.mxu0 0
        %614 = vmatpush1.bf16.xpose.msra.mxu0 0
        %615 = vmatprep.subr.bf16.mxu0 0
        %616 = vmatpush1.bf16.xpose.msra.mxu0 0
        %617 = vmatprep.subr.bf16.mxu0 0
        %618 = vmatpush1.bf16.xpose.msra.mxu0 0
        %619 = vmatprep.subr.bf16.mxu0 0
        %620 = vmatpush1.bf16.xpose.msra.mxu0 0
        %621 = vmatprep.subr.bf16.mxu0 0
        %622 = vmatpush1.bf16.xpose.msra.mxu0 0
        %623 = vmatprep.subr.bf16.mxu0 0
        %624 = vmatpush1.bf16.xpose.msra.mxu0 0
        %625 = vmatprep.subr.bf16.mxu0 0
        %626 = vmatpush1.bf16.xpose.msra.mxu0 0
        %627 = vmatprep.subr.bf16.mxu0 0
        %628 = vmatpush1.bf16.xpose.msra.mxu0 0
        %629 = vmatprep.subr.bf16.mxu0 0
        %630 = vmatpush1.bf16.xpose.msra.mxu0 0
        %631 = vmatprep.subr.bf16.mxu0 0
        %632 = vmatpush1.bf16.xpose.msra.mxu0 0
        %633 = vmatprep.subr.bf16.mxu0 0
        %634 = vmatpush1.bf16.xpose.msra.mxu0 0
        %635 = vmatprep.mubr.bf16.mxu0 0
        %636 = vmatmul.mubr.bf16.gmra.mrb[0].mxu0 %v598
        %v637 = vpop.f32.mrb[0].mxu0
        %v638 = vadd.f32 0.0, %v637
        %v639 = vpop.f32.mrb[0].mxu0
        %v640 = vpop.f32.mrb[0].mxu0
        %v641 = vadd.f32 0.0, %v640
        %v642 = vpop.f32.mrb[0].mxu0
        %643 = vdwg.mxu0
        %v645 = vsel %vm549, %v539, 0
        %v648 = vsel %vm549, %v543, 0
        %650 = vmatprep.subr.bf16.mxu0 0
        %651 = vmatpush1.bf16.xpose.msra.mxu0 %v648
        %652 = vmatprep.subr.bf16.mxu0 0
        %653 = vmatpush1.bf16.xpose.msra.mxu0 0
        %654 = vmatprep.subr.bf16.mxu0 0
        %655 = vmatpush1.bf16.xpose.msra.mxu0 0
        %656 = vmatprep.subr.bf16.mxu0 0
        %657 = vmatpush1.bf16.xpose.msra.mxu0 0
        %658 = vmatprep.subr.bf16.mxu0 0
        %659 = vmatpush1.bf16.xpose.msra.mxu0 0
        %660 = vmatprep.subr.bf16.mxu0 0
        %661 = vmatpush1.bf16.xpose.msra.mxu0 0
        %662 = vmatprep.subr.bf16.mxu0 0
        %663 = vmatpush1.bf16.xpose.msra.mxu0 0
        %664 = vmatprep.subr.bf16.mxu0 0
        %665 = vmatpush1.bf16.xpose.msra.mxu0 0
        %666 = vmatprep.subr.bf16.mxu0 0
        %667 = vmatpush1.bf16.xpose.msra.mxu0 0
        %668 = vmatprep.subr.bf16.mxu0 0
        %669 = vmatpush1.bf16.xpose.msra.mxu0 0
        %670 = vmatprep.subr.bf16.mxu0 0
        %671 = vmatpush1.bf16.xpose.msra.mxu0 0
        %672 = vmatprep.subr.bf16.mxu0 0
        %673 = vmatpush1.bf16.xpose.msra.mxu0 0
        %674 = vmatprep.subr.bf16.mxu0 0
        %675 = vmatpush1.bf16.xpose.msra.mxu0 0
        %676 = vmatprep.subr.bf16.mxu0 0
        %677 = vmatpush1.bf16.xpose.msra.mxu0 0
        %678 = vmatprep.subr.bf16.mxu0 0
        %679 = vmatpush1.bf16.xpose.msra.mxu0 0
        %680 = vmatprep.subr.bf16.mxu0 0
        %681 = vmatpush1.bf16.xpose.msra.mxu0 0
        %682 = vmatprep.mubr.bf16.mxu0 0
        %683 = vmatmul.mubr.bf16.gmra.mrb[0].mxu0 %v645
        %v684 = vpop.f32.mrb[0].mxu0
        %v685 = vadd.f32 0.0, %v684
        %v686 = vpop.f32.mrb[0].mxu0
        %v687 = vpop.f32.mrb[0].mxu0
        %v688 = vadd.f32 0.0, %v687
        %v689 = vpop.f32.mrb[0].mxu0
        %690 = vdwg.mxu0
        %v692 = vsel %vm549, %v540, 0
        %v695 = vsel %vm549, %v544, 0
        %697 = vmatprep.subr.bf16.mxu0 0
        %698 = vmatpush1.bf16.xpose.msra.mxu0 %v695
        %699 = vmatprep.subr.bf16.mxu0 0
        %700 = vmatpush1.bf16.xpose.msra.mxu0 0
        %701 = vmatprep.subr.bf16.mxu0 0
        %702 = vmatpush1.bf16.xpose.msra.mxu0 0
        %703 = vmatprep.subr.bf16.mxu0 0
        %704 = vmatpush1.bf16.xpose.msra.mxu0 0
        %705 = vmatprep.subr.bf16.mxu0 0
        %706 = vmatpush1.bf16.xpose.msra.mxu0 0
        %707 = vmatprep.subr.bf16.mxu0 0
        %708 = vmatpush1.bf16.xpose.msra.mxu0 0
        %709 = vmatprep.subr.bf16.mxu0 0
        %710 = vmatpush1.bf16.xpose.msra.mxu0 0
        %711 = vmatprep.subr.bf16.mxu0 0
        %712 = vmatpush1.bf16.xpose.msra.mxu0 0
        %713 = vmatprep.subr.bf16.mxu0 0
        %714 = vmatpush1.bf16.xpose.msra.mxu0 0
        %715 = vmatprep.subr.bf16.mxu0 0
        %716 = vmatpush1.bf16.xpose.msra.mxu0 0
        %717 = vmatprep.subr.bf16.mxu0 0
        %718 = vmatpush1.bf16.xpose.msra.mxu0 0
        %719 = vmatprep.subr.bf16.mxu0 0
        %720 = vmatpush1.bf16.xpose.msra.mxu0 0
        %721 = vmatprep.subr.bf16.mxu0 0
        %722 = vmatpush1.bf16.xpose.msra.mxu0 0
        %723 = vmatprep.subr.bf16.mxu0 0
        %724 = vmatpush1.bf16.xpose.msra.mxu0 0
        %725 = vmatprep.subr.bf16.mxu0 0
        %726 = vmatpush1.bf16.xpose.msra.mxu0 0
        %727 = vmatprep.subr.bf16.mxu0 0
        %728 = vmatpush1.bf16.xpose.msra.mxu0 0
        %729 = vmatprep.mubr.bf16.mxu0 0
        %730 = vmatmul.mubr.bf16.gmra.mrb[0].mxu0 %v692
        %v731 = vpop.f32.mrb[0].mxu0
        %v732 = vadd.f32 0.0, %v731
        %v733 = vpop.f32.mrb[0].mxu0
        %v734 = vpop.f32.mrb[0].mxu0
        %v735 = vadd.f32 0.0, %v734
        %v736 = vpop.f32.mrb[0].mxu0
        %737 = vdwg.mxu0
        %vm738 = vcmask 130048
        %v739 = vsel %vm738, %v591, -inf
        %740 = vmax.xlane.f32.xlu0 %v739
        %v741 = vpop.xlane.xlu0 %740
        %v742 = vsel %vm738, %v594, -inf
        %743 = vmax.xlane.f32.xlu0 %v742
        %v744 = vpop.xlane.xlu0 %743
        %v745 = vsel %vm738, %v638, -inf
        %746 = vmax.xlane.f32.xlu0 %v745
        %v747 = vpop.xlane.xlu0 %746
        %v748 = vsel %vm738, %v641, -inf
        %749 = vmax.xlane.f32.xlu0 %v748
        %v750 = vpop.xlane.xlu0 %749
        %v751 = vsel %vm738, %v685, -inf
        %752 = vmax.xlane.f32.xlu0 %v751
        %v753 = vpop.xlane.xlu0 %752
        %v754 = vsel %vm738, %v688, -inf
        %755 = vmax.xlane.f32.xlu0 %v754
        %v756 = vpop.xlane.xlu0 %755
        %v757 = vsel %vm738, %v732, -inf
        %758 = vmax.xlane.f32.xlu0 %v757
        %v759 = vpop.xlane.xlu0 %758
        %v760 = vsel %vm738, %v735, -inf
        %761 = vmax.xlane.f32.xlu0 %v760
        %v762 = vpop.xlane.xlu0 %761
        %v763 = vsub.f32 %v591, %v741
        %v764 = vsub.f32 %v594, %v744
        %v765 = vsub.f32 %v638, %v747
        %v766 = vsub.f32 %v641, %v750
        %v767 = vsub.f32 %v685, %v753
        %v768 = vsub.f32 %v688, %v756
        %v769 = vsub.f32 %v732, %v759
        %v770 = vsub.f32 %v735, %v762
        %v771 = vmul.f32 %v763, 1.442695
        %v772 = vpow.pop %v771
        %v773 = vmul.f32 %v764, 1.442695
        %v774 = vpow.pop %v773
        %v775 = vmul.f32 %v765, 1.442695
        %v776 = vpow.pop %v775
        %v777 = vmul.f32 %v766, 1.442695
        %v778 = vpow.pop %v777
        %v779 = vmul.f32 %v767, 1.442695
        %v780 = vpow.pop %v779
        %v781 = vmul.f32 %v768, 1.442695
        %v782 = vpow.pop %v781
        %v783 = vmul.f32 %v769, 1.442695
        %v784 = vpow.pop %v783
        %v785 = vmul.f32 %v770, 1.442695
        %v786 = vpow.pop %v785
        %v787 = vsel %vm738, %v772, 0.0
        %788 = vadd.xlane.f32.xlu0 %v787
        %v789 = vpop.xlane.xlu0 %788
        %v790 = vsel %vm738, %v774, 0.0
        %791 = vadd.xlane.f32.xlu0 %v790
        %v792 = vpop.xlane.xlu0 %791
        %v793 = vsel %vm738, %v776, 0.0
        %794 = vadd.xlane.f32.xlu0 %v793
        %v795 = vpop.xlane.xlu0 %794
        %v796 = vsel %vm738, %v778, 0.0
        %797 = vadd.xlane.f32.xlu0 %v796
        %v798 = vpop.xlane.xlu0 %797
        %v799 = vsel %vm738, %v780, 0.0
        %800 = vadd.xlane.f32.xlu0 %v799
        %v801 = vpop.xlane.xlu0 %800
        %v802 = vsel %vm738, %v782, 0.0
        %803 = vadd.xlane.f32.xlu0 %v802
        %v804 = vpop.xlane.xlu0 %803
        %v805 = vsel %vm738, %v784, 0.0
        %806 = vadd.xlane.f32.xlu0 %v805
        %v807 = vpop.xlane.xlu0 %806
        %v808 = vsel %vm738, %v786, 0.0
        %809 = vadd.xlane.f32.xlu0 %v808
        %v810 = vpop.xlane.xlu0 %809
        %v811 = vpack.c.bf16 %v774, %v772
        %v812 = vpack.c.bf16 %v778, %v776
        %v813 = vpack.c.bf16 %v782, %v780
        %v814 = vpack.c.bf16 %v786, %v784
        %v816 = vsel %vm738, %v811, 0
        %818 = vmatprep.subr.bf16.mxu0 0
        %819 = vmatpush1.bf16.msra.mxu0 %v545
        %820 = vmatprep.subr.bf16.mxu0 0
        %821 = vmatpush1.bf16.msra.mxu0 0
        %822 = vmatprep.subr.bf16.mxu0 0
        %823 = vmatpush1.bf16.msra.mxu0 0
        %824 = vmatprep.subr.bf16.mxu0 0
        %825 = vmatpush1.bf16.msra.mxu0 0
        %826 = vmatprep.subr.bf16.mxu0 0
        %827 = vmatpush1.bf16.msra.mxu0 0
        %828 = vmatprep.subr.bf16.mxu0 0
        %829 = vmatpush1.bf16.msra.mxu0 0
        %830 = vmatprep.subr.bf16.mxu0 0
        %831 = vmatpush1.bf16.msra.mxu0 0
        %832 = vmatprep.subr.bf16.mxu0 0
        %833 = vmatpush1.bf16.msra.mxu0 0
        %834 = vmatprep.subr.bf16.mxu0 0
        %835 = vmatpush1.bf16.msra.mxu0 0
        %836 = vmatprep.subr.bf16.mxu0 0
        %837 = vmatpush1.bf16.msra.mxu0 0
        %838 = vmatprep.subr.bf16.mxu0 0
        %839 = vmatpush1.bf16.msra.mxu0 0
        %840 = vmatprep.subr.bf16.mxu0 0
        %841 = vmatpush1.bf16.msra.mxu0 0
        %842 = vmatprep.subr.bf16.mxu0 0
        %843 = vmatpush1.bf16.msra.mxu0 0
        %844 = vmatprep.subr.bf16.mxu0 0
        %845 = vmatpush1.bf16.msra.mxu0 0
        %846 = vmatprep.subr.bf16.mxu0 0
        %847 = vmatpush1.bf16.msra.mxu0 0
        %848 = vmatprep.subr.bf16.mxu0 0
        %849 = vmatpush1.bf16.msra.mxu0 0
        %850 = vmatprep.mubr.bf16.mxu0 0
        %851 = vmatmul.mubr.bf16.gmra.mrb[0].mxu0 %v816
        %v852 = vpop.f32.mrb[0].mxu0
        %v853 = vadd.f32 0.0, %v852
        %v854 = vpop.f32.mrb[0].mxu0
        %v855 = vpop.f32.mrb[0].mxu0
        %v856 = vadd.f32 0.0, %v855
        %v857 = vpop.f32.mrb[0].mxu0
        %858 = vdwg.mxu0
        %v860 = vsel %vm738, %v812, 0
        %862 = vmatprep.subr.bf16.mxu0 0
        %863 = vmatpush1.bf16.msra.mxu0 %v546
        %864 = vmatprep.subr.bf16.mxu0 0
        %865 = vmatpush1.bf16.msra.mxu0 0
        %866 = vmatprep.subr.bf16.mxu0 0
        %867 = vmatpush1.bf16.msra.mxu0 0
        %868 = vmatprep.subr.bf16.mxu0 0
        %869 = vmatpush1.bf16.msra.mxu0 0
        %870 = vmatprep.subr.bf16.mxu0 0
        %871 = vmatpush1.bf16.msra.mxu0 0
        %872 = vmatprep.subr.bf16.mxu0 0
        %873 = vmatpush1.bf16.msra.mxu0 0
        %874 = vmatprep.subr.bf16.mxu0 0
        %875 = vmatpush1.bf16.msra.mxu0 0
        %876 = vmatprep.subr.bf16.mxu0 0
        %877 = vmatpush1.bf16.msra.mxu0 0
        %878 = vmatprep.subr.bf16.mxu0 0
        %879 = vmatpush1.bf16.msra.mxu0 0
        %880 = vmatprep.subr.bf16.mxu0 0
        %881 = vmatpush1.bf16.msra.mxu0 0
        %882 = vmatprep.subr.bf16.mxu0 0
        %883 = vmatpush1.bf16.msra.mxu0 0
        %884 = vmatprep.subr.bf16.mxu0 0
        %885 = vmatpush1.bf16.msra.mxu0 0
        %886 = vmatprep.subr.bf16.mxu0 0
        %887 = vmatpush1.bf16.msra.mxu0 0
        %888 = vmatprep.subr.bf16.mxu0 0
        %889 = vmatpush1.bf16.msra.mxu0 0
        %890 = vmatprep.subr.bf16.mxu0 0
        %891 = vmatpush1.bf16.msra.mxu0 0
        %892 = vmatprep.subr.bf16.mxu0 0
        %893 = vmatpush1.bf16.msra.mxu0 0
        %894 = vmatprep.mubr.bf16.mxu0 0
        %895 = vmatmul.mubr.bf16.gmra.mrb[0].mxu0 %v860
        %v896 = vpop.f32.mrb[0].mxu0
        %v897 = vadd.f32 0.0, %v896
        %v898 = vpop.f32.mrb[0].mxu0
        %v899 = vpop.f32.mrb[0].mxu0
        %v900 = vadd.f32 0.0, %v899
        %v901 = vpop.f32.mrb[0].mxu0
        %902 = vdwg.mxu0
        %v904 = vsel %vm738, %v813, 0
        %906 = vmatprep.subr.bf16.mxu0 0
        %907 = vmatpush1.bf16.msra.mxu0 %v547
        %908 = vmatprep.subr.bf16.mxu0 0
        %909 = vmatpush1.bf16.msra.mxu0 0
        %910 = vmatprep.subr.bf16.mxu0 0
        %911 = vmatpush1.bf16.msra.mxu0 0
        %912 = vmatprep.subr.bf16.mxu0 0
        %913 = vmatpush1.bf16.msra.mxu0 0
        %914 = vmatprep.subr.bf16.mxu0 0
        %915 = vmatpush1.bf16.msra.mxu0 0
        %916 = vmatprep.subr.bf16.mxu0 0
        %917 = vmatpush1.bf16.msra.mxu0 0
        %918 = vmatprep.subr.bf16.mxu0 0
        %919 = vmatpush1.bf16.msra.mxu0 0
        %920 = vmatprep.subr.bf16.mxu0 0
        %921 = vmatpush1.bf16.msra.mxu0 0
        %922 = vmatprep.subr.bf16.mxu0 0
        %923 = vmatpush1.bf16.msra.mxu0 0
        %924 = vmatprep.subr.bf16.mxu0 0
        %925 = vmatpush1.bf16.msra.mxu0 0
        %926 = vmatprep.subr.bf16.mxu0 0
        %927 = vmatpush1.bf16.msra.mxu0 0
        %928 = vmatprep.subr.bf16.mxu0 0
        %929 = vmatpush1.bf16.msra.mxu0 0
        %930 = vmatprep.subr.bf16.mxu0 0
        %931 = vmatpush1.bf16.msra.mxu0 0
        %932 = vmatprep.subr.bf16.mxu0 0
        %933 = vmatpush1.bf16.msra.mxu0 0
        %934 = vmatprep.subr.bf16.mxu0 0
        %935 = vmatpush1.bf16.msra.mxu0 0
        %936 = vmatprep.subr.bf16.mxu0 0
        %937 = vmatpush1.bf16.msra.mxu0 0
        %938 = vmatprep.mubr.bf16.mxu0 0
        %939 = vmatmul.mubr.bf16.gmra.mrb[0].mxu0 %v904
        %v940 = vpop.f32.mrb[0].mxu0
        %v941 = vadd.f32 0.0, %v940
        %v942 = vpop.f32.mrb[0].mxu0
        %v943 = vpop.f32.mrb[0].mxu0
        %v944 = vadd.f32 0.0, %v943
        %v945 = vpop.f32.mrb[0].mxu0
        %946 = vdwg.mxu0
        %v948 = vsel %vm738, %v814, 0
        %950 = vmatprep.subr.bf16.mxu0 0
        %951 = vmatpush1.bf16.msra.mxu0 %v548
        %952 = vmatprep.subr.bf16.mxu0 0
        %953 = vmatpush1.bf16.msra.mxu0 0
        %954 = vmatprep.subr.bf16.mxu0 0
        %955 = vmatpush1.bf16.msra.mxu0 0
        %956 = vmatprep.subr.bf16.mxu0 0
        %957 = vmatpush1.bf16.msra.mxu0 0
        %958 = vmatprep.subr.bf16.mxu0 0
        %959 = vmatpush1.bf16.msra.mxu0 0
        %960 = vmatprep.subr.bf16.mxu0 0
        %961 = vmatpush1.bf16.msra.mxu0 0
        %962 = vmatprep.subr.bf16.mxu0 0
        %963 = vmatpush1.bf16.msra.mxu0 0
        %964 = vmatprep.subr.bf16.mxu0 0
        %965 = vmatpush1.bf16.msra.mxu0 0
        %966 = vmatprep.subr.bf16.mxu0 0
        %967 = vmatpush1.bf16.msra.mxu0 0
        %968 = vmatprep.subr.bf16.mxu0 0
        %969 = vmatpush1.bf16.msra.mxu0 0
        %970 = vmatprep.subr.bf16.mxu0 0
        %971 = vmatpush1.bf16.msra.mxu0 0
        %972 = vmatprep.subr.bf16.mxu0 0
        %973 = vmatpush1.bf16.msra.mxu0 0
        %974 = vmatprep.subr.bf16.mxu0 0
        %975 = vmatpush1.bf16.msra.mxu0 0
        %976 = vmatprep.subr.bf16.mxu0 0
        %977 = vmatpush1.bf16.msra.mxu0 0
        %978 = vmatprep.subr.bf16.mxu0 0
        %979 = vmatpush1.bf16.msra.mxu0 0
        %980 = vmatprep.subr.bf16.mxu0 0
        %981 = vmatpush1.bf16.msra.mxu0 0
        %982 = vmatprep.mubr.bf16.mxu0 0
        %983 = vmatmul.mubr.bf16.gmra.mrb[0].mxu0 %v948
        %v984 = vpop.f32.mrb[0].mxu0
        %v985 = vadd.f32 0.0, %v984
        %v986 = vpop.f32.mrb[0].mxu0
        %v987 = vpop.f32.mrb[0].mxu0
        %v988 = vadd.f32 0.0, %v987
        %v989 = vpop.f32.mrb[0].mxu0
        %990 = vdwg.mxu0
        %v991 = vrcp.pop %v789
        %v992 = vrcp.pop %v792
        %v993 = vrcp.pop %v795
        %v994 = vrcp.pop %v798
        %v995 = vrcp.pop %v801
        %v996 = vrcp.pop %v804
        %v997 = vrcp.pop %v807
        %v998 = vrcp.pop %v810
        %v999 = vmul.f32 %v853, %v991
        %v1000 = vmul.f32 %v856, %v992
        %v1001 = vmul.f32 %v897, %v993
        %v1002 = vmul.f32 %v900, %v994
        %v1003 = vmul.f32 %v941, %v995
        %v1004 = vmul.f32 %v944, %v996
        %v1005 = vmul.f32 %v985, %v997
        %v1006 = vmul.f32 %v988, %v998
        %v1007 = vpack.c.bf16 %v1000, %v999
        %v1008 = vld [vmem:[#allocation9] sm:$0xf]
        %v1009 = vpack.c.bf16 %v1002, %v1001
        %s1010 = scalar_lea.vmem [#allocation9], 4
        %v1011 = vld [vmem:[%s1010] sm:$0xf]
        %v1013 = vsel %vm549, %v1009, 0
        %vm1015 = vcmask 1043456
        %v1017 = vsel %vm1015, %v1011, 0
        %1019 = vmatprep.subr.bf16.mxu0 0
        %1020 = vmatpush1.bf16.msra.mxu0 %v1017
        %1021 = vmatprep.subr.bf16.mxu0 0
        %1022 = vmatpush1.bf16.msra.mxu0 0
        %1023 = vmatprep.subr.bf16.mxu0 0
        %1024 = vmatpush1.bf16.msra.mxu0 0
        %1025 = vmatprep.subr.bf16.mxu0 0
        %1026 = vmatpush1.bf16.msra.mxu0 0
        %1027 = vmatprep.subr.bf16.mxu0 0
        %1028 = vmatpush1.bf16.msra.mxu0 0
        %1029 = vmatprep.subr.bf16.mxu0 0
        %1030 = vmatpush1.bf16.msra.mxu0 0
        %1031 = vmatprep.subr.bf16.mxu0 0
        %1032 = vmatpush1.bf16.msra.mxu0 0
        %1033 = vmatprep.subr.bf16.mxu0 0
        %1034 = vmatpush1.bf16.msra.mxu0 0
        %1035 = vmatprep.subr.bf16.mxu0 0
        %1036 = vmatpush1.bf16.msra.mxu0 0
        %1037 = vmatprep.subr.bf16.mxu0 0
        %1038 = vmatpush1.bf16.msra.mxu0 0
        %1039 = vmatprep.subr.bf16.mxu0 0
        %1040 = vmatpush1.bf16.msra.mxu0 0
        %1041 = vmatprep.subr.bf16.mxu0 0
        %1042 = vmatpush1.bf16.msra.mxu0 0
        %1043 = vmatprep.subr.bf16.mxu0 0
        %1044 = vmatpush1.bf16.msra.mxu0 0
        %1045 = vmatprep.subr.bf16.mxu0 0
        %1046 = vmatpush1.bf16.msra.mxu0 0
        %1047 = vmatprep.subr.bf16.mxu0 0
        %1048 = vmatpush1.bf16.msra.mxu0 0
        %1049 = vmatprep.subr.bf16.mxu0 0
        %1050 = vmatpush1.bf16.msra.mxu0 0
        %1051 = vmatprep.mubr.bf16.mxu0 0
        %1052 = vmatmul.mubr.bf16.gmra.mrb[0].mxu0 %v1013
        %v1053 = vpop.f32.mrb[0].mxu0
        %v1054 = vadd.f32 0.0, %v1053
        %v1055 = vpop.f32.mrb[0].mxu0
        %v1056 = vpop.f32.mrb[0].mxu0
        %v1057 = vadd.f32 0.0, %v1056
        %v1058 = vpop.f32.mrb[0].mxu0
        %1059 = vdwg.mxu0
        %v1061 = vsel %vm549, %v1007, 0
        %v1064 = vsel %vm1015, %v1008, 0
        %1066 = vmatprep.subr.bf16.mxu0 0
        %1067 = vmatpush1.bf16.msra.mxu0 %v1064
        %1068 = vmatprep.subr.bf16.mxu0 0
        %1069 = vmatpush1.bf16.msra.mxu0 0
        %1070 = vmatprep.subr.bf16.mxu0 0
        %1071 = vmatpush1.bf16.msra.mxu0 0
        %1072 = vmatprep.subr.bf16.mxu0 0
        %1073 = vmatpush1.bf16.msra.mxu0 0
        %1074 = vmatprep.subr.bf16.mxu0 0
        %1075 = vmatpush1.bf16.msra.mxu0 0
        %1076 = vmatprep.subr.bf16.mxu0 0
        %1077 = vmatpush1.bf16.msra.mxu0 0
        %1078 = vmatprep.subr.bf16.mxu0 0
        %1079 = vmatpush1.bf16.msra.mxu0 0
        %1080 = vmatprep.subr.bf16.mxu0 0
        %1081 = vmatpush1.bf16.msra.mxu0 0
        %1082 = vmatprep.subr.bf16.mxu0 0
        %1083 = vmatpush1.bf16.msra.mxu0 0
        %1084 = vmatprep.subr.bf16.mxu0 0
        %1085 = vmatpush1.bf16.msra.mxu0 0
        %1086 = vmatprep.subr.bf16.mxu0 0
        %1087 = vmatpush1.bf16.msra.mxu0 0
        %1088 = vmatprep.subr.bf16.mxu0 0
        %1089 = vmatpush1.bf16.msra.mxu0 0
        %1090 = vmatprep.subr.bf16.mxu0 0
        %1091 = vmatpush1.bf16.msra.mxu0 0
        %1092 = vmatprep.subr.bf16.mxu0 0
        %1093 = vmatpush1.bf16.msra.mxu0 0
        %1094 = vmatprep.subr.bf16.mxu0 0
        %1095 = vmatpush1.bf16.msra.mxu0 0
        %1096 = vmatprep.subr.bf16.mxu0 0
        %1097 = vmatpush1.bf16.msra.mxu0 0
        %1098 = vmatprep.mubr.bf16.mxu0 0
        %1099 = vmatmul.mubr.bf16.gmra.mrb[0].mxu0 %v1061
        %v1100 = vpop.f32.mrb[0].mxu0
        %v1101 = vadd.f32 %v1054, %v1100
        %v1102 = vpop.f32.mrb[0].mxu0
        %v1103 = vpop.f32.mrb[0].mxu0
        %v1104 = vadd.f32 %v1057, %v1103
        %v1105 = vpop.f32.mrb[0].mxu0
        %1106 = vdwg.mxu0
        %v1107 = vpack.c.bf16 %v1004, %v1003
        %s1108 = scalar_lea.vmem [#allocation9], 8
        %v1109 = vld [vmem:[%s1108] sm:$0xf]
        %v1111 = vsel %vm549, %v1107, 0
        %v1114 = vsel %vm1015, %v1109, 0
        %1116 = vmatprep.subr.bf16.mxu0 0
        %1117 = vmatpush1.bf16.msra.mxu0 %v1114
        %1118 = vmatprep.subr.bf16.mxu0 0
        %1119 = vmatpush1.bf16.msra.mxu0 0
        %1120 = vmatprep.subr.bf16.mxu0 0
        %1121 = vmatpush1.bf16.msra.mxu0 0
        %1122 = vmatprep.subr.bf16.mxu0 0
        %1123 = vmatpush1.bf16.msra.mxu0 0
        %1124 = vmatprep.subr.bf16.mxu0 0
        %1125 = vmatpush1.bf16.msra.mxu0 0
        %1126 = vmatprep.subr.bf16.mxu0 0
        %1127 = vmatpush1.bf16.msra.mxu0 0
        %1128 = vmatprep.subr.bf16.mxu0 0
        %1129 = vmatpush1.bf16.msra.mxu0 0
        %1130 = vmatprep.subr.bf16.mxu0 0
        %1131 = vmatpush1.bf16.msra.mxu0 0
        %1132 = vmatprep.subr.bf16.mxu0 0
        %1133 = vmatpush1.bf16.msra.mxu0 0
        %1134 = vmatprep.subr.bf16.mxu0 0
        %1135 = vmatpush1.bf16.msra.mxu0 0
        %1136 = vmatprep.subr.bf16.mxu0 0
        %1137 = vmatpush1.bf16.msra.mxu0 0
        %1138 = vmatprep.subr.bf16.mxu0 0
        %1139 = vmatpush1.bf16.msra.mxu0 0
        %1140 = vmatprep.subr.bf16.mxu0 0
        %1141 = vmatpush1.bf16.msra.mxu0 0
        %1142 = vmatprep.subr.bf16.mxu0 0
        %1143 = vmatpush1.bf16.msra.mxu0 0
        %1144 = vmatprep.subr.bf16.mxu0 0
        %1145 = vmatpush1.bf16.msra.mxu0 0
        %1146 = vmatprep.subr.bf16.mxu0 0
        %1147 = vmatpush1.bf16.msra.mxu0 0
        %1148 = vmatprep.mubr.bf16.mxu0 0
        %1149 = vmatmul.mubr.bf16.gmra.mrb[0].mxu0 %v1111
        %v1150 = vpop.f32.mrb[0].mxu0
        %v1151 = vadd.f32 0.0, %v1150
        %v1152 = vpop.f32.mrb[0].mxu0
        %v1153 = vpop.f32.mrb[0].mxu0
        %v1154 = vadd.f32 0.0, %v1153
        %v1155 = vpop.f32.mrb[0].mxu0
        %1156 = vdwg.mxu0
        %v1157 = vadd.f32 %v1101, %v1151
        %v1158 = vadd.f32 %v1104, %v1154
        %v1159 = vpack.c.bf16 %v1006, %v1005
        %s1160 = scalar_lea.vmem [#allocation9], 12
        %v1161 = vld [vmem:[%s1160] sm:$0xf]
        %v1163 = vsel %vm549, %v1159, 0
        %v1166 = vsel %vm1015, %v1161, 0
        %1168 = vmatprep.subr.bf16.mxu0 0
        %1169 = vmatpush1.bf16.msra.mxu0 %v1166
        %1170 = vmatprep.subr.bf16.mxu0 0
        %1171 = vmatpush1.bf16.msra.mxu0 0
        %1172 = vmatprep.subr.bf16.mxu0 0
        %1173 = vmatpush1.bf16.msra.mxu0 0
        %1174 = vmatprep.subr.bf16.mxu0 0
        %1175 = vmatpush1.bf16.msra.mxu0 0
        %1176 = vmatprep.subr.bf16.mxu0 0
        %1177 = vmatpush1.bf16.msra.mxu0 0
        %1178 = vmatprep.subr.bf16.mxu0 0
        %1179 = vmatpush1.bf16.msra.mxu0 0
        %1180 = vmatprep.subr.bf16.mxu0 0
        %1181 = vmatpush1.bf16.msra.mxu0 0
        %1182 = vmatprep.subr.bf16.mxu0 0
        %1183 = vmatpush1.bf16.msra.mxu0 0
        %1184 = vmatprep.subr.bf16.mxu0 0
        %1185 = vmatpush1.bf16.msra.mxu0 0
        %1186 = vmatprep.subr.bf16.mxu0 0
        %1187 = vmatpush1.bf16.msra.mxu0 0
        %1188 = vmatprep.subr.bf16.mxu0 0
        %1189 = vmatpush1.bf16.msra.mxu0 0
        %1190 = vmatprep.subr.bf16.mxu0 0
        %1191 = vmatpush1.bf16.msra.mxu0 0
        %1192 = vmatprep.subr.bf16.mxu0 0
        %1193 = vmatpush1.bf16.msra.mxu0 0
        %1194 = vmatprep.subr.bf16.mxu0 0
        %1195 = vmatpush1.bf16.msra.mxu0 0
        %1196 = vmatprep.subr.bf16.mxu0 0
        %1197 = vmatpush1.bf16.msra.mxu0 0
        %1198 = vmatprep.subr.bf16.mxu0 0
        %1199 = vmatpush1.bf16.msra.mxu0 0
        %1200 = vmatprep.mubr.bf16.mxu0 0
        %1201 = vmatmul.mubr.bf16.gmra.mrb[0].mxu0 %v1163
        %v1202 = vpop.f32.mrb[0].mxu0
        %v1203 = vadd.f32 0.0, %v1202
        %v1204 = vpop.f32.mrb[0].mxu0
        %v1205 = vpop.f32.mrb[0].mxu0
        %v1206 = vadd.f32 0.0, %v1205
        %v1207 = vpop.f32.mrb[0].mxu0
        %1208 = vdwg.mxu0
        %v1209 = vadd.f32 %v1157, %v1203
        %v1210 = vadd.f32 %v1158, %v1206
        %v1211 = vld [vmem:[%s3] sm:$0x1]
        %v1213 = vlaneseq
        %v1214 = vshrl.u32 %v1213, 7
        %v1215 = vsub.s32 0, %v1214
        %v1216 = vrot.slane %v1211, %v1215
        %v1218 = vadd.f32 %v1209, %v1216
        %v1219 = vadd.f32 %v1210, %v1216
        %1220 = vst.msk [vmem:[%s258] sm:$0xff] %vm472, %v1218
        %1221 = vst.msk [vmem:[%s258 + $0x8] sm:$0xff] %vm472, %v1219
        %s1222 = sand.u32 %s133, 1
        %s1223 = scalar_lea.sflag [#allocation6], %s1222
        %s1224 = sand.u32 %s133, 1
        %s1225 = smul.addr %s1224, 16
        %s1226 = scalar_lea.vmem [#allocation10], %s1225
        // Predicated region
        $region53: #{tpu_custom_call.1} parent=35 // pred_check
          %p1227 = pneg %p143
        $region54: #{tpu_custom_call.1} parent=35 // pred_check_branch
          %1229 = sbr.rel (%p1227) target = $region56
        $region55: #{tpu_custom_call.1} parent=35 // pred_region
          %s1230 = smul.u32 2, %s27
          %s1232 = ssub.s32 256, 256
          %1233 = vsyncadd %s1223, %s1232
          %s1234 = smul.addr %s26, 2
          %s1235 = sadd.s32 %s1230, %s1234
          %s1236 = smul.addr %s1235, 128
          %s1237 = scalar_lea.hbm %s4, %s1236
          %s1238 = sshll.u32 %s1226, 4
          %s1239 = int_to_ptr.vmem [resolvable:$true] %s1238
          %1244 = dma.vmem_to_hbm [thread:$0]  %s1239, 256, %s1237, %s1223, 128, 128, 8
        $region56: #{tpu_custom_call.1} parent=35 // pred_fallthru
          _
      $region36: #{tpu_custom_call.1} parent=5 // pred_fallthru
        _
      %p1245 = scmp.le.s32.totalorder 2, %s17
      // Predicated region
      $region57: #{tpu_custom_call.1} parent=5 // pred_check
        %p1246 = pneg %p1245
      $region58: #{tpu_custom_call.1} parent=5 // pred_check_branch
        %1248 = sbr.rel (%p1246) target = $region60
      $region59: #{tpu_custom_call.1} parent=5 // pred_region
        %s1249 = ssub.s32 %s17, 2
        // Predicated region
        $region61: #{tpu_custom_call.1} parent=59 // pred_check
          %p1250 = pneg %p149
        $region62: #{tpu_custom_call.1} parent=59 // pred_check_branch
          %1252 = sbr.rel (%p1250) target = $region64
        $region63: #{tpu_custom_call.1} parent=59 // pred_region
          %s1253 = sand.u32 %s134, 1
          %s1254 = scalar_lea.sflag [#allocation6], %s1253
          %s1255 = sand.u32 %s134, 1
          %s1256 = smul.addr %s1255, 16
          %s1257 = scalar_lea.vmem [#allocation10], %s1256
          %1258 = dma.done %s1254, 256
        $region64: #{tpu_custom_call.1} parent=59 // pred_fallthru
          _
      $region60: #{tpu_custom_call.1} parent=5 // pred_fallthru
        _
    $region6: #{tpu_custom_call.1} parent=1 // loop_footer
      %s21 = sadd.s32 1, %s17
    $region7: #{tpu_custom_call.1} parent=1 // loop_footer_branch
      %16 = sbr.rel target = $region3
    $region8: #{tpu_custom_call.1} parent=1 // loop_exit
      _
    %1259 = vsyncpa [#allocation5], 1
    %s1260 = scalar_lea.sflag [#allocation5], 1
    %1261 = vsyncpa %s1260, 1
    %1262 = vsyncpa [#allocation8], 1
    %1263 = vsyncpa [#allocation6], 1
    %s1264 = scalar_lea.sflag [#allocation6], 1
    %1265 = vsyncpa %s1264, 1

</llo_original>
